<compile_context>
chip_gen: v6e
topology: v6e:2x2x1
jax: 0.10.0
libtpu: 0.0.40
codegen_flags: <defaults>
</compile_context>

<pallas_src>
import functools

import jax
import jax.numpy as jnp
from jax.experimental import pallas as pl
from jax.experimental.pallas import tpu as pltpu


def _mhsa_kernel(x_ref, g_ref, beta_ref, win_ref, bin_ref, wout_ref, bout_ref,
                 o_ref, *, num_head, scale):
    f32 = jnp.float32
    x = x_ref[...].astype(f32)                      # (Bt, S, E)
    bt, S, E = x.shape
    Dh = E // num_head

    # ---- LayerNorm over embedding axis (eps=1e-5, biased variance) ----
    mu = jnp.mean(x, axis=-1, keepdims=True)
    xc = x - mu
    var = jnp.mean(xc * xc, axis=-1, keepdims=True)
    xn = xc / jnp.sqrt(var + 1e-5)
    xn = xn * g_ref[...].astype(f32) + beta_ref[...].astype(f32)

    # ---- fused QKV projection: (Bt*S, E) @ (E, 3E) on the MXU ----
    xn2 = xn.reshape(bt * S, E)
    qkv = jnp.dot(xn2, win_ref[...].astype(f32),
                  preferred_element_type=f32) + bin_ref[...].astype(f32)  # (Bt*S, 3E)

    # ---- per-head scaled dot-product attention ----
    head_outs = []
    for h in range(num_head):
        lo = h * Dh
        qh = qkv[:, lo:lo + Dh].reshape(bt, S, Dh) * scale
        kh = qkv[:, E + lo:E + lo + Dh].reshape(bt, S, Dh)
        vh = qkv[:, 2 * E + lo:2 * E + lo + Dh].reshape(bt, S, Dh)

        s = jnp.einsum('bqd,bkd->bqk', qh, kh,
                       preferred_element_type=f32)            # (Bt, S, S)
        s = s - jnp.max(s, axis=-1, keepdims=True)
        p = jnp.exp(s)
        p = p / jnp.sum(p, axis=-1, keepdims=True)
        head_outs.append(jnp.einsum('bqk,bkd->bqd', p, vh,
                                    preferred_element_type=f32))
    attn = jnp.concatenate(head_outs, axis=-1)                # (Bt, S, E)

    # ---- output projection ----
    out = jnp.dot(attn.reshape(bt * S, E), wout_ref[...].astype(f32),
                  preferred_element_type=f32) + bout_ref[...].astype(f32)
    o_ref[...] = out.reshape(bt, S, E).astype(o_ref.dtype)


def rtg_mhsa_block(x, ln_gamma, ln_beta, in_proj_w, in_proj_b,
                   out_proj_w, out_proj_b, *, num_head, batch_block=None):
    """x: (B, S, E). in_proj_w: (3E, E), in_proj_b: (3E,),
    out_proj_w: (E, E), out_proj_b: (E,), ln_gamma/ln_beta: (E,)."""
    B, S, E = x.shape
    assert E % num_head == 0
    Dh = E // num_head
    scale = float(1.0 / (Dh ** 0.5))

    # Batch several sequences per grid step (fat blocks; avoids tiny-tile
    # pipeline overhead). Pick the largest divisor of B up to 8.
    if batch_block is None:
        batch_block = 1
        for d in range(min(B, 8), 0, -1):
            if B % d == 0:
                batch_block = d
                break
    bt = batch_block
    grid = (B // bt,)

    f32 = jnp.float32
    w_in_t = in_proj_w.T.astype(f32)               # (E, 3E)
    w_out_t = out_proj_w.T.astype(f32)             # (E, E)
    b_in = in_proj_b.reshape(1, 3 * E).astype(f32)
    b_out = out_proj_b.reshape(1, E).astype(f32)
    gamma = ln_gamma.reshape(1, E).astype(f32)
    beta = ln_beta.reshape(1, E).astype(f32)

    kernel = functools.partial(_mhsa_kernel, num_head=num_head, scale=scale)

    # Advisory cost hint: QKV + out-proj matmuls + attention, x read + out write.
    flops = (2 * B * S * E * 3 * E) + (2 * B * S * E * E) \
        + (4 * B * num_head * S * S * Dh)
    bytes_accessed = 4 * (2 * B * S * E + 4 * E * E + 6 * E)
    transcendentals = B * num_head * S * S + B * S

    out = pl.pallas_call(
        kernel,
        out_shape=jax.ShapeDtypeStruct((B, S, E), x.dtype),
        grid=grid,
        in_specs=[
            pl.BlockSpec((bt, S, E), lambda i: (i, 0, 0)),    # x
            pl.BlockSpec((1, E), lambda i: (0, 0)),           # LN gamma
            pl.BlockSpec((1, E), lambda i: (0, 0)),           # LN beta
            pl.BlockSpec((E, 3 * E), lambda i: (0, 0)),       # W_in^T
            pl.BlockSpec((1, 3 * E), lambda i: (0, 0)),       # b_in
            pl.BlockSpec((E, E), lambda i: (0, 0)),           # W_out^T
            pl.BlockSpec((1, E), lambda i: (0, 0)),           # b_out
        ],
        out_specs=pl.BlockSpec((bt, S, E), lambda i: (i, 0, 0)),
        compiler_params=pltpu.CompilerParams(
            dimension_semantics=("parallel",),
            vmem_limit_bytes=32 * 1024 * 1024,   # safe on v5e/v6e/v7x
        ),
        cost_estimate=pl.CostEstimate(
            flops=flops,
            transcendentals=transcendentals,
            bytes_accessed=bytes_accessed),
    )(x, gamma, beta, w_in_t, b_in, w_out_t, b_out)
    return out


def _reference(x, ln_gamma, ln_beta, in_proj_w, in_proj_b,
               out_proj_w, out_proj_b, *, num_head):
    # Pure-JAX mirror of the PyTorch forward.
    B, S, E = x.shape
    Dh = E // num_head
    mu = jnp.mean(x, axis=-1, keepdims=True)
    var = jnp.mean((x - mu) ** 2, axis=-1, keepdims=True)
    xn = (x - mu) / jnp.sqrt(var + 1e-5) * ln_gamma + ln_beta
    qkv = xn @ in_proj_w.T + in_proj_b                        # (B, S, 3E)
    q, k, v = jnp.split(qkv, 3, axis=-1)

    def split_heads(t):
        return t.reshape(B, S, num_head, Dh).transpose(0, 2, 1, 3)  # (B,H,S,Dh)

    qh, kh, vh = split_heads(q), split_heads(k), split_heads(v)
    scores = jnp.einsum('bhqd,bhkd->bhqk', qh, kh) / jnp.sqrt(jnp.float32(Dh))
    p = jax.nn.softmax(scores, axis=-1)
    o = jnp.einsum('bhqk,bhkd->bhqd', p, vh)
    o = o.transpose(0, 2, 1, 3).reshape(B, S, E)
    return o @ out_proj_w.T + out_proj_b


if __name__ == "__main__":
    # Small shapes consistent with the module: batch=2, seq=8, embed=32, heads=4.
    B, S, E, H = 2, 8, 32, 4

    key = jax.random.PRNGKey(0)
    ks = jax.random.split(key, 7)

    x = jax.random.normal(ks[0], (B, S, E), dtype=jnp.float32)
    ln_gamma = 1.0 + 0.1 * jax.random.normal(ks[1], (E,), dtype=jnp.float32)
    ln_beta = 0.1 * jax.random.normal(ks[2], (E,), dtype=jnp.float32)

    bound = 1.0 / jnp.sqrt(float(E))
    w_in = jax.random.uniform(ks[3], (3 * E, E), jnp.float32, -bound, bound)
    b_in = jax.random.uniform(ks[4], (3 * E,), jnp.float32, -bound, bound)
    w_out = jax.random.uniform(ks[5], (E, E), jnp.float32, -bound, bound)
    b_out = jax.random.uniform(ks[6], (E,), jnp.float32, -bound, bound)

    # TODO(synk): attention_dropout > 0 (training-time dropout mask) is not
    # implemented; the module default is 0, which is an identity in forward.

    out = rtg_mhsa_block(x, ln_gamma, ln_beta, w_in, b_in, w_out, b_out,
                         num_head=H)
    out = jax.block_until_ready(out)

    ref = _reference(x, ln_gamma, ln_beta, w_in, b_in, w_out, b_out,
                     num_head=H)
    assert out.shape == (B, S, E)
    err = float(jnp.max(jnp.abs(out - ref)))
    assert jnp.allclose(out, ref, atol=2e-3, rtol=2e-3), f"max abs err {err}"

    print("KERNEL_OK")
</pallas_src>

<mosaic_0001>
module attributes {stable_mosaic.version = 11 : i64} {
  func.func @_mhsa_kernel(%arg0: i32, %arg1: memref<2x8x32xf32, #tpu.memory_space<vmem>>, %arg2: memref<1x32xf32, #tpu.memory_space<vmem>>, %arg3: memref<1x32xf32, #tpu.memory_space<vmem>>, %arg4: memref<32x96xf32, #tpu.memory_space<vmem>>, %arg5: memref<1x96xf32, #tpu.memory_space<vmem>>, %arg6: memref<32x32xf32, #tpu.memory_space<vmem>>, %arg7: memref<1x32xf32, #tpu.memory_space<vmem>>, %arg8: memref<2x8x32xf32, #tpu.memory_space<vmem>>) attributes {dimension_semantics = [#tpu.dimension_semantics<parallel>], iteration_bounds = array<i64: 1>, scalar_prefetch = 0 : i64, scratch_operands = 0 : i64, tpu.core_type = #tpu.core_type<tc>, window_params = [{transform_indices = @transform_0, window_bounds = array<i64: 2, 8, 32>}, {pipeline_mode = #tpu.pipeline_mode<synchronous>, transform_indices = @transform_1, window_bounds = array<i64: 1, 32>}, {pipeline_mode = #tpu.pipeline_mode<synchronous>, transform_indices = @transform_2, window_bounds = array<i64: 1, 32>}, {pipeline_mode = #tpu.pipeline_mode<synchronous>, transform_indices = @transform_3, window_bounds = array<i64: 32, 96>}, {pipeline_mode = #tpu.pipeline_mode<synchronous>, transform_indices = @transform_4, window_bounds = array<i64: 1, 96>}, {pipeline_mode = #tpu.pipeline_mode<synchronous>, transform_indices = @transform_5, window_bounds = array<i64: 32, 32>}, {pipeline_mode = #tpu.pipeline_mode<synchronous>, transform_indices = @transform_6, window_bounds = array<i64: 1, 32>}, {transform_indices = @transform_7, window_bounds = array<i64: 2, 8, 32>}]} {
    %c0 = arith.constant 0 : index
    %c0_0 = arith.constant 0 : index
    %c0_1 = arith.constant 0 : index
    %0 = vector.load %arg1[%c0, %c0_0, %c0_1] : memref<2x8x32xf32, #tpu.memory_space<vmem>>, vector<2x8x32xf32>
    %cst = arith.constant dense<0.000000e+00> : vector<2x8xf32>
    %1 = vector.multi_reduction <add>, %0, %cst [2] : vector<2x8x32xf32> to vector<2x8xf32>
    %2 = vector.shape_cast %1 : vector<2x8xf32> to vector<2x8x1xf32>
    %cst_2 = arith.constant 3.200000e+01 : f32
    %3 = vector.broadcast %cst_2 : f32 to vector<2x8x1xf32>
    %4 = arith.divf %2, %3 : vector<2x8x1xf32>
    %5 = vector.broadcast %4 : vector<2x8x1xf32> to vector<2x8x32xf32>
    %6 = arith.subf %0, %5 : vector<2x8x32xf32>
    %7 = arith.mulf %6, %6 : vector<2x8x32xf32>
    %cst_3 = arith.constant dense<0.000000e+00> : vector<2x8xf32>
    %8 = vector.multi_reduction <add>, %7, %cst_3 [2] : vector<2x8x32xf32> to vector<2x8xf32>
    %9 = vector.shape_cast %8 : vector<2x8xf32> to vector<2x8x1xf32>
    %cst_4 = arith.constant 3.200000e+01 : f32
    %10 = vector.broadcast %cst_4 : f32 to vector<2x8x1xf32>
    %11 = arith.divf %9, %10 : vector<2x8x1xf32>
    %cst_5 = arith.constant 9.99999974E-6 : f32
    %12 = vector.broadcast %cst_5 : f32 to vector<2x8x1xf32>
    %13 = arith.addf %11, %12 : vector<2x8x1xf32>
    %14 = math.sqrt %13 : vector<2x8x1xf32>
    %15 = vector.broadcast %14 : vector<2x8x1xf32> to vector<2x8x32xf32>
    %16 = arith.divf %6, %15 : vector<2x8x32xf32>
    %c0_6 = arith.constant 0 : index
    %c0_7 = arith.constant 0 : index
    %17 = vector.load %arg2[%c0_6, %c0_7] : memref<1x32xf32, #tpu.memory_space<vmem>>, vector<1x32xf32>
    %18 = vector.shape_cast %17 : vector<1x32xf32> to vector<1x1x32xf32>
    %19 = vector.broadcast %18 : vector<1x1x32xf32> to vector<2x8x32xf32>
    %20 = arith.mulf %16, %19 : vector<2x8x32xf32>
    %c0_8 = arith.constant 0 : index
    %c0_9 = arith.constant 0 : index
    %21 = vector.load %arg3[%c0_8, %c0_9] : memref<1x32xf32, #tpu.memory_space<vmem>>, vector<1x32xf32>
    %22 = vector.shape_cast %21 : vector<1x32xf32> to vector<1x1x32xf32>
    %23 = vector.broadcast %22 : vector<1x1x32xf32> to vector<2x8x32xf32>
    %24 = arith.addf %20, %23 : vector<2x8x32xf32>
    %25 = vector.shape_cast %24 : vector<2x8x32xf32> to vector<16x32xf32>
    %c0_10 = arith.constant 0 : index
    %c0_11 = arith.constant 0 : index
    %26 = vector.load %arg4[%c0_10, %c0_11] : memref<32x96xf32, #tpu.memory_space<vmem>>, vector<32x96xf32>
    %cst_12 = arith.constant dense<0.000000e+00> : vector<16x96xf32>
    %27 = tpu.matmul %25, %26, %cst_12 {dimension_numbers = #tpu.dot_dimension_numbers<[1], [0], [0], [1], [0, 0, 1, 1], [], []>} : vector<16x32xf32>, vector<32x96xf32>, vector<16x96xf32> -> vector<16x96xf32>
    %c0_13 = arith.constant 0 : index
    %c0_14 = arith.constant 0 : index
    %28 = vector.load %arg5[%c0_13, %c0_14] : memref<1x96xf32, #tpu.memory_space<vmem>>, vector<1x96xf32>
    %29 = vector.broadcast %28 : vector<1x96xf32> to vector<16x96xf32>
    %30 = arith.addf %27, %29 : vector<16x96xf32>
    %31 = vector.extract_strided_slice %30 {offsets = [0, 0], sizes = [16, 8], strides = [1, 1]} : vector<16x96xf32> to vector<16x8xf32>
    %32 = vector.shape_cast %31 : vector<16x8xf32> to vector<2x8x8xf32>
    %cst_15 = arith.constant 0.353553385 : f32
    %33 = vector.broadcast %cst_15 : f32 to vector<2x8x8xf32>
    %34 = arith.mulf %32, %33 : vector<2x8x8xf32>
    %35 = vector.extract_strided_slice %30 {offsets = [0, 32], sizes = [16, 8], strides = [1, 1]} : vector<16x96xf32> to vector<16x8xf32>
    %36 = vector.shape_cast %35 : vector<16x8xf32> to vector<2x8x8xf32>
    %37 = vector.extract_strided_slice %30 {offsets = [0, 64], sizes = [16, 8], strides = [1, 1]} : vector<16x96xf32> to vector<16x8xf32>
    %38 = vector.shape_cast %37 : vector<16x8xf32> to vector<2x8x8xf32>
    "tpu.trace_start"() <{level = 10 : i32, message = "bqd,bkd->bqk"}> : () -> ()
    %cst_16 = arith.constant dense<0.000000e+00> : vector<2x8x8xf32>
    %39 = tpu.matmul %34, %36, %cst_16 {dimension_numbers = #tpu.dot_dimension_numbers<[2], [2], [1], [1], [0, 0, 0, 1, 1, 1], [0], [0]>} : vector<2x8x8xf32>, vector<2x8x8xf32>, vector<2x8x8xf32> -> vector<2x8x8xf32>
    "tpu.trace_stop"() : () -> ()
    %cst_17 = arith.constant dense<0xFF800000> : vector<2x8xf32>
    %40 = vector.multi_reduction <maximumf>, %39, %cst_17 [2] : vector<2x8x8xf32> to vector<2x8xf32>
    %41 = vector.shape_cast %40 : vector<2x8xf32> to vector<2x8x1xf32>
    %42 = vector.broadcast %41 : vector<2x8x1xf32> to vector<2x8x8xf32>
    %43 = arith.subf %39, %42 : vector<2x8x8xf32>
    %44 = math.exp %43 : vector<2x8x8xf32>
    %cst_18 = arith.constant dense<0.000000e+00> : vector<2x8xf32>
    %45 = vector.multi_reduction <add>, %44, %cst_18 [2] : vector<2x8x8xf32> to vector<2x8xf32>
    %46 = vector.shape_cast %45 : vector<2x8xf32> to vector<2x8x1xf32>
    %47 = vector.broadcast %46 : vector<2x8x1xf32> to vector<2x8x8xf32>
    %48 = arith.divf %44, %47 : vector<2x8x8xf32>
    "tpu.trace_start"() <{level = 10 : i32, message = "bqk,bkd->bqd"}> : () -> ()
    %cst_19 = arith.constant dense<0.000000e+00> : vector<2x8x8xf32>
    %49 = tpu.matmul %48, %38, %cst_19 {dimension_numbers = #tpu.dot_dimension_numbers<[2], [1], [1], [2], [0, 0, 0, 1, 1, 2], [0], [0]>} : vector<2x8x8xf32>, vector<2x8x8xf32>, vector<2x8x8xf32> -> vector<2x8x8xf32>
    "tpu.trace_stop"() : () -> ()
    %50 = vector.extract_strided_slice %30 {offsets = [0, 8], sizes = [16, 8], strides = [1, 1]} : vector<16x96xf32> to vector<16x8xf32>
    %51 = vector.shape_cast %50 : vector<16x8xf32> to vector<2x8x8xf32>
    %cst_20 = arith.constant 0.353553385 : f32
    %52 = vector.broadcast %cst_20 : f32 to vector<2x8x8xf32>
    %53 = arith.mulf %51, %52 : vector<2x8x8xf32>
    %54 = vector.extract_strided_slice %30 {offsets = [0, 40], sizes = [16, 8], strides = [1, 1]} : vector<16x96xf32> to vector<16x8xf32>
    %55 = vector.shape_cast %54 : vector<16x8xf32> to vector<2x8x8xf32>
    %56 = vector.extract_strided_slice %30 {offsets = [0, 72], sizes = [16, 8], strides = [1, 1]} : vector<16x96xf32> to vector<16x8xf32>
    %57 = vector.shape_cast %56 : vector<16x8xf32> to vector<2x8x8xf32>
    "tpu.trace_start"() <{level = 10 : i32, message = "bqd,bkd->bqk"}> : () -> ()
    %cst_21 = arith.constant dense<0.000000e+00> : vector<2x8x8xf32>
    %58 = tpu.matmul %53, %55, %cst_21 {dimension_numbers = #tpu.dot_dimension_numbers<[2], [2], [1], [1], [0, 0, 0, 1, 1, 1], [0], [0]>} : vector<2x8x8xf32>, vector<2x8x8xf32>, vector<2x8x8xf32> -> vector<2x8x8xf32>
    "tpu.trace_stop"() : () -> ()
    %cst_22 = arith.constant dense<0xFF800000> : vector<2x8xf32>
    %59 = vector.multi_reduction <maximumf>, %58, %cst_22 [2] : vector<2x8x8xf32> to vector<2x8xf32>
    %60 = vector.shape_cast %59 : vector<2x8xf32> to vector<2x8x1xf32>
    %61 = vector.broadcast %60 : vector<2x8x1xf32> to vector<2x8x8xf32>
    %62 = arith.subf %58, %61 : vector<2x8x8xf32>
    %63 = math.exp %62 : vector<2x8x8xf32>
    %cst_23 = arith.constant dense<0.000000e+00> : vector<2x8xf32>
    %64 = vector.multi_reduction <add>, %63, %cst_23 [2] : vector<2x8x8xf32> to vector<2x8xf32>
    %65 = vector.shape_cast %64 : vector<2x8xf32> to vector<2x8x1xf32>
    %66 = vector.broadcast %65 : vector<2x8x1xf32> to vector<2x8x8xf32>
    %67 = arith.divf %63, %66 : vector<2x8x8xf32>
    "tpu.trace_start"() <{level = 10 : i32, message = "bqk,bkd->bqd"}> : () -> ()
    %cst_24 = arith.constant dense<0.000000e+00> : vector<2x8x8xf32>
    %68 = tpu.matmul %67, %57, %cst_24 {dimension_numbers = #tpu.dot_dimension_numbers<[2], [1], [1], [2], [0, 0, 0, 1, 1, 2], [0], [0]>} : vector<2x8x8xf32>, vector<2x8x8xf32>, vector<2x8x8xf32> -> vector<2x8x8xf32>
    "tpu.trace_stop"() : () -> ()
    %69 = vector.extract_strided_slice %30 {offsets = [0, 16], sizes = [16, 8], strides = [1, 1]} : vector<16x96xf32> to vector<16x8xf32>
    %70 = vector.shape_cast %69 : vector<16x8xf32> to vector<2x8x8xf32>
    %cst_25 = arith.constant 0.353553385 : f32
    %71 = vector.broadcast %cst_25 : f32 to vector<2x8x8xf32>
    %72 = arith.mulf %70, %71 : vector<2x8x8xf32>
    %73 = vector.extract_strided_slice %30 {offsets = [0, 48], sizes = [16, 8], strides = [1, 1]} : vector<16x96xf32> to vector<16x8xf32>
    %74 = vector.shape_cast %73 : vector<16x8xf32> to vector<2x8x8xf32>
    %75 = vector.extract_strided_slice %30 {offsets = [0, 80], sizes = [16, 8], strides = [1, 1]} : vector<16x96xf32> to vector<16x8xf32>
    %76 = vector.shape_cast %75 : vector<16x8xf32> to vector<2x8x8xf32>
    "tpu.trace_start"() <{level = 10 : i32, message = "bqd,bkd->bqk"}> : () -> ()
    %cst_26 = arith.constant dense<0.000000e+00> : vector<2x8x8xf32>
    %77 = tpu.matmul %72, %74, %cst_26 {dimension_numbers = #tpu.dot_dimension_numbers<[2], [2], [1], [1], [0, 0, 0, 1, 1, 1], [0], [0]>} : vector<2x8x8xf32>, vector<2x8x8xf32>, vector<2x8x8xf32> -> vector<2x8x8xf32>
    "tpu.trace_stop"() : () -> ()
    %cst_27 = arith.constant dense<0xFF800000> : vector<2x8xf32>
    %78 = vector.multi_reduction <maximumf>, %77, %cst_27 [2] : vector<2x8x8xf32> to vector<2x8xf32>
    %79 = vector.shape_cast %78 : vector<2x8xf32> to vector<2x8x1xf32>
    %80 = vector.broadcast %79 : vector<2x8x1xf32> to vector<2x8x8xf32>
    %81 = arith.subf %77, %80 : vector<2x8x8xf32>
    %82 = math.exp %81 : vector<2x8x8xf32>
    %cst_28 = arith.constant dense<0.000000e+00> : vector<2x8xf32>
    %83 = vector.multi_reduction <add>, %82, %cst_28 [2] : vector<2x8x8xf32> to vector<2x8xf32>
    %84 = vector.shape_cast %83 : vector<2x8xf32> to vector<2x8x1xf32>
    %85 = vector.broadcast %84 : vector<2x8x1xf32> to vector<2x8x8xf32>
    %86 = arith.divf %82, %85 : vector<2x8x8xf32>
    "tpu.trace_start"() <{level = 10 : i32, message = "bqk,bkd->bqd"}> : () -> ()
    %cst_29 = arith.constant dense<0.000000e+00> : vector<2x8x8xf32>
    %87 = tpu.matmul %86, %76, %cst_29 {dimension_numbers = #tpu.dot_dimension_numbers<[2], [1], [1], [2], [0, 0, 0, 1, 1, 2], [0], [0]>} : vector<2x8x8xf32>, vector<2x8x8xf32>, vector<2x8x8xf32> -> vector<2x8x8xf32>
    "tpu.trace_stop"() : () -> ()
    %88 = vector.extract_strided_slice %30 {offsets = [0, 24], sizes = [16, 8], strides = [1, 1]} : vector<16x96xf32> to vector<16x8xf32>
    %89 = vector.shape_cast %88 : vector<16x8xf32> to vector<2x8x8xf32>
    %cst_30 = arith.constant 0.353553385 : f32
    %90 = vector.broadcast %cst_30 : f32 to vector<2x8x8xf32>
    %91 = arith.mulf %89, %90 : vector<2x8x8xf32>
    %92 = vector.extract_strided_slice %30 {offsets = [0, 56], sizes = [16, 8], strides = [1, 1]} : vector<16x96xf32> to vector<16x8xf32>
    %93 = vector.shape_cast %92 : vector<16x8xf32> to vector<2x8x8xf32>
    %94 = vector.extract_strided_slice %30 {offsets = [0, 88], sizes = [16, 8], strides = [1, 1]} : vector<16x96xf32> to vector<16x8xf32>
    %95 = vector.shape_cast %94 : vector<16x8xf32> to vector<2x8x8xf32>
    "tpu.trace_start"() <{level = 10 : i32, message = "bqd,bkd->bqk"}> : () -> ()
    %cst_31 = arith.constant dense<0.000000e+00> : vector<2x8x8xf32>
    %96 = tpu.matmul %91, %93, %cst_31 {dimension_numbers = #tpu.dot_dimension_numbers<[2], [2], [1], [1], [0, 0, 0, 1, 1, 1], [0], [0]>} : vector<2x8x8xf32>, vector<2x8x8xf32>, vector<2x8x8xf32> -> vector<2x8x8xf32>
    "tpu.trace_stop"() : () -> ()
    %cst_32 = arith.constant dense<0xFF800000> : vector<2x8xf32>
    %97 = vector.multi_reduction <maximumf>, %96, %cst_32 [2] : vector<2x8x8xf32> to vector<2x8xf32>
    %98 = vector.shape_cast %97 : vector<2x8xf32> to vector<2x8x1xf32>
    %99 = vector.broadcast %98 : vector<2x8x1xf32> to vector<2x8x8xf32>
    %100 = arith.subf %96, %99 : vector<2x8x8xf32>
    %101 = math.exp %100 : vector<2x8x8xf32>
    %cst_33 = arith.constant dense<0.000000e+00> : vector<2x8xf32>
    %102 = vector.multi_reduction <add>, %101, %cst_33 [2] : vector<2x8x8xf32> to vector<2x8xf32>
    %103 = vector.shape_cast %102 : vector<2x8xf32> to vector<2x8x1xf32>
    %104 = vector.broadcast %103 : vector<2x8x1xf32> to vector<2x8x8xf32>
    %105 = arith.divf %101, %104 : vector<2x8x8xf32>
    "tpu.trace_start"() <{level = 10 : i32, message = "bqk,bkd->bqd"}> : () -> ()
    %cst_34 = arith.constant dense<0.000000e+00> : vector<2x8x8xf32>
    %106 = tpu.matmul %105, %95, %cst_34 {dimension_numbers = #tpu.dot_dimension_numbers<[2], [1], [1], [2], [0, 0, 0, 1, 1, 2], [0], [0]>} : vector<2x8x8xf32>, vector<2x8x8xf32>, vector<2x8x8xf32> -> vector<2x8x8xf32>
    "tpu.trace_stop"() : () -> ()
    %107 = tpu.concatenate %49, %68, %87, %106 in 2 : vector<2x8x8xf32>, vector<2x8x8xf32>, vector<2x8x8xf32>, vector<2x8x8xf32> -> vector<2x8x32xf32>
    %108 = vector.shape_cast %107 : vector<2x8x32xf32> to vector<16x32xf32>
    %c0_35 = arith.constant 0 : index
    %c0_36 = arith.constant 0 : index
    %109 = vector.load %arg6[%c0_35, %c0_36] : memref<32x32xf32, #tpu.memory_space<vmem>>, vector<32x32xf32>
    %cst_37 = arith.constant dense<0.000000e+00> : vector<16x32xf32>
    %110 = tpu.matmul %108, %109, %cst_37 {dimension_numbers = #tpu.dot_dimension_numbers<[1], [0], [0], [1], [0, 0, 1, 1], [], []>} : vector<16x32xf32>, vector<32x32xf32>, vector<16x32xf32> -> vector<16x32xf32>
    %c0_38 = arith.constant 0 : index
    %c0_39 = arith.constant 0 : index
    %111 = vector.load %arg7[%c0_38, %c0_39] : memref<1x32xf32, #tpu.memory_space<vmem>>, vector<1x32xf32>
    %112 = vector.broadcast %111 : vector<1x32xf32> to vector<16x32xf32>
    %113 = arith.addf %110, %112 : vector<16x32xf32>
    %114 = vector.shape_cast %113 : vector<16x32xf32> to vector<2x8x32xf32>
    %c0_40 = arith.constant 0 : index
    %c0_41 = arith.constant 0 : index
    %c0_42 = arith.constant 0 : index
    %115 = vector.load %arg8[%c0_40, %c0_41, %c0_42] : memref<2x8x32xf32, #tpu.memory_space<vmem>>, vector<2x8x32xf32>
    tpu.vector_store %arg8[%c0_40, %c0_41, %c0_42], %114 {strides = array<i32>} : memref<2x8x32xf32, #tpu.memory_space<vmem>>, vector<2x8x32xf32>,
    return
  }
  func.func @transform_0(%arg0: i32) -> (i32, i32, i32) {
    %c0_i32 = arith.constant 0 : i32
    %c0_i32_0 = arith.constant 0 : i32
    %c0_i32_1 = arith.constant 0 : i32
    return %arg0, %c0_i32, %c0_i32_0 : i32, i32, i32
  }
  func.func @transform_1(%arg0: i32) -> (i32, i32) {
    %c0_i32 = arith.constant 0 : i32
    %c0_i32_0 = arith.constant 0 : i32
    %c0_i32_1 = arith.constant 0 : i32
    return %c0_i32, %c0_i32_0 : i32, i32
  }
  func.func @transform_2(%arg0: i32) -> (i32, i32) {
    %c0_i32 = arith.constant 0 : i32
    %c0_i32_0 = arith.constant 0 : i32
    %c0_i32_1 = arith.constant 0 : i32
    return %c0_i32, %c0_i32_0 : i32, i32
  }
  func.func @transform_3(%arg0: i32) -> (i32, i32) {
    %c0_i32 = arith.constant 0 : i32
    %c0_i32_0 = arith.constant 0 : i32
    %c0_i32_1 = arith.constant 0 : i32
    return %c0_i32, %c0_i32_0 : i32, i32
  }
  func.func @transform_4(%arg0: i32) -> (i32, i32) {
    %c0_i32 = arith.constant 0 : i32
    %c0_i32_0 = arith.constant 0 : i32
    %c0_i32_1 = arith.constant 0 : i32
    return %c0_i32, %c0_i32_0 : i32, i32
  }
  func.func @transform_5(%arg0: i32) -> (i32, i32) {
    %c0_i32 = arith.constant 0 : i32
    %c0_i32_0 = arith.constant 0 : i32
    %c0_i32_1 = arith.constant 0 : i32
    return %c0_i32, %c0_i32_0 : i32, i32
  }
  func.func @transform_6(%arg0: i32) -> (i32, i32) {
    %c0_i32 = arith.constant 0 : i32
    %c0_i32_0 = arith.constant 0 : i32
    %c0_i32_1 = arith.constant 0 : i32
    return %c0_i32, %c0_i32_0 : i32, i32
  }
  func.func @transform_7(%arg0: i32) -> (i32, i32, i32) {
    %c0_i32 = arith.constant 0 : i32
    %c0_i32_0 = arith.constant 0 : i32
    %c0_i32_1 = arith.constant 0 : i32
    return %arg0, %c0_i32, %c0_i32_0 : i32, i32, i32
  }
}

</mosaic_0001>

<llo_original>
// kernel: tpu_custom_call.1
$region0: #{tpu_custom_call.1}
  #allocation0 [shape = 'u32[]', space=smem, size = 0x4, offset = 0x4, fixed_abs, tag = 'smem constant byte address 0x4 - core index']
  #allocation1 [shape = 'u32[144,128]{1,0:T(1,128)}', space=vmem, size = 0x12000, scoped, tag = 'internal scratch']
  %s0 = inlined_call_operand.hbm [shape: f32[2,8,32], index: 0, kind: input, shape index: {}]
  %s1 = inlined_call_operand.vmem [shape: f32[1,32], index: 1, kind: input, shape index: {}]
  %s2 = inlined_call_operand.vmem [shape: f32[1,32], index: 2, kind: input, shape index: {}]
  %s3 = inlined_call_operand.hbm [shape: f32[32,96], index: 3, kind: input, shape index: {}]
  %s4 = inlined_call_operand.vmem [shape: f32[1,96], index: 4, kind: input, shape index: {}]
  %s5 = inlined_call_operand.hbm [shape: f32[32,32], index: 5, kind: input, shape index: {}]
  %s6 = inlined_call_operand.vmem [shape: f32[1,32], index: 6, kind: input, shape index: {}]
  %s7 = inlined_call_operand.hbm [shape: f32[2,8,32], index: 7, kind: output, shape index: {}]
  %s8 = sld [smem:[#allocation0]]
  $region50: #{tpu_custom_call.1} parent=0
    _
  %s10 = ssub.s32 1, %s8
  %s11 = scalar_select 0, %s10, %s8
  $region1: #{tpu_custom_call.1} parent=0
    #allocation2 [shape = 'u8[8192]{0}', space=vmem, size = 0x2000, scoped, tag = 'input window, operand 0, single buffered']
    #allocation3 [shape = 's32[1]{0}', space=sflag, size = 0x4, scoped, tag = 'scoped memory for tpu_custom_call.1']
    #allocation4 [shape = 's32[1]{0}', space=sflag, size = 0x4, scoped, tag = 'scoped memory for tpu_custom_call.1']
    #allocation5 [shape = 'u8[16384]{0}', space=vmem, size = 0x4000, scoped, tag = 'input window, operand 3, single buffered']
    #allocation6 [shape = 's32[1]{0}', space=sflag, size = 0x4, scoped, tag = 'scoped memory for tpu_custom_call.1']
    #allocation7 [shape = 'u8[16384]{0}', space=vmem, size = 0x4000, scoped, tag = 'input window, operand 5, single buffered']
    #allocation8 [shape = 'u8[8192]{0}', space=vmem, size = 0x2000, scoped, tag = 'output window, operand 0, single buffered']
    %12 = vsyncpa [#allocation3], 0
    %13 = vsyncpa [#allocation6], 0
    %14 = vsyncpa [#allocation4], 0
    // Predicated region
    $region2: #{tpu_custom_call.1} parent=1 // pred_check
      _
    $region3: #{tpu_custom_call.1} parent=1 // pred_check_branch
      %16 = sbr.rel (0) target = $region5
    $region4: #{tpu_custom_call.1} parent=1 // pred_region
      %s18 = ssub.s32 256, 256
      %19 = vsyncadd [#allocation3], %s18
      %s20 = sshll.u32 [#allocation2], 4
      %s21 = int_to_ptr.vmem [resolvable:$true] %s20
      %26 = dma.hbm_to_vmem [thread:$0]  %s0, 256, %s21, [#allocation3], 128, 128, 8
    $region5: #{tpu_custom_call.1} parent=1 // pred_fallthru
      _
    // Predicated region
    $region6: #{tpu_custom_call.1} parent=1 // pred_check
      _
    $region7: #{tpu_custom_call.1} parent=1 // pred_check_branch
      %28 = sbr.rel (0) target = $region9
    $region8: #{tpu_custom_call.1} parent=1 // pred_region
      _
    $region9: #{tpu_custom_call.1} parent=1 // pred_fallthru
      _
    // Predicated region
    $region10: #{tpu_custom_call.1} parent=1 // pred_check
      _
    $region11: #{tpu_custom_call.1} parent=1 // pred_check_branch
      %30 = sbr.rel (0) target = $region13
    $region12: #{tpu_custom_call.1} parent=1 // pred_region
      _
    $region13: #{tpu_custom_call.1} parent=1 // pred_fallthru
      _
    // Predicated region
    $region14: #{tpu_custom_call.1} parent=1 // pred_check
      _
    $region15: #{tpu_custom_call.1} parent=1 // pred_check_branch
      %32 = sbr.rel (0) target = $region17
    $region16: #{tpu_custom_call.1} parent=1 // pred_region
      %s34 = ssub.s32 512, 512
      %35 = vsyncadd [#allocation6], %s34
      %s36 = sshll.u32 [#allocation5], 4
      %s37 = int_to_ptr.vmem [resolvable:$true] %s36
      %42 = dma.hbm_to_vmem [thread:$0]  %s3, 512, %s37, [#allocation6], 128, 128, 8
    $region17: #{tpu_custom_call.1} parent=1 // pred_fallthru
      _
    // Predicated region
    $region18: #{tpu_custom_call.1} parent=1 // pred_check
      _
    $region19: #{tpu_custom_call.1} parent=1 // pred_check_branch
      %44 = sbr.rel (0) target = $region21
    $region20: #{tpu_custom_call.1} parent=1 // pred_region
      _
    $region21: #{tpu_custom_call.1} parent=1 // pred_fallthru
      _
    // Predicated region
    $region22: #{tpu_custom_call.1} parent=1 // pred_check
      _
    $region23: #{tpu_custom_call.1} parent=1 // pred_check_branch
      %46 = sbr.rel (0) target = $region25
    $region24: #{tpu_custom_call.1} parent=1 // pred_region
      %s48 = ssub.s32 512, 512
      %49 = vsyncadd [#allocation6], %s48
      %s50 = sshll.u32 [#allocation7], 4
      %s51 = int_to_ptr.vmem [resolvable:$true] %s50
      %56 = dma.hbm_to_vmem [thread:$0]  %s5, 512, %s51, [#allocation6], 128, 128, 8
    $region25: #{tpu_custom_call.1} parent=1 // pred_fallthru
      _
    // Predicated region
    $region26: #{tpu_custom_call.1} parent=1 // pred_check
      _
    $region27: #{tpu_custom_call.1} parent=1 // pred_check_branch
      %58 = sbr.rel (0) target = $region29
    $region28: #{tpu_custom_call.1} parent=1 // pred_region
      _
    $region29: #{tpu_custom_call.1} parent=1 // pred_fallthru
      _
    // Predicated region
    $region30: #{tpu_custom_call.1} parent=1 // pred_check
      _
    $region31: #{tpu_custom_call.1} parent=1 // pred_check_branch
      %60 = sbr.rel (0) target = $region33
    $region32: #{tpu_custom_call.1} parent=1 // pred_region
      %61 = dma.done [#allocation3], 256
    $region33: #{tpu_custom_call.1} parent=1 // pred_fallthru
      _
    // Predicated region
    $region34: #{tpu_custom_call.1} parent=1 // pred_check
      _
    $region35: #{tpu_custom_call.1} parent=1 // pred_check_branch
      %63 = sbr.rel (0) target = $region37
    $region36: #{tpu_custom_call.1} parent=1 // pred_region
      %64 = dma.done [#allocation6], 512
    $region37: #{tpu_custom_call.1} parent=1 // pred_fallthru
      _
    // Predicated region
    $region38: #{tpu_custom_call.1} parent=1 // pred_check
      _
    $region39: #{tpu_custom_call.1} parent=1 // pred_check_branch
      %66 = sbr.rel (0) target = $region41
    $region40: #{tpu_custom_call.1} parent=1 // pred_region
      %67 = dma.done [#allocation6], 512
    $region41: #{tpu_custom_call.1} parent=1 // pred_fallthru
      _
    %v68 = vld [vmem:[#allocation2] sm:$0xff]
    %v69 = vld [vmem:[#allocation2 + $0x8] sm:$0xff]
    %vm70 = vcmask 261120
    %v71 = vsel %vm70, %v68, 0.0
    %72 = vadd.xlane.f32.xlu0 %v71
    %v73 = vpop.xlane.xlu0 %72
    %v74 = vsel %vm70, %v69, 0.0
    %75 = vadd.xlane.f32.xlu0 %v74
    %v76 = vpop.xlane.xlu0 %75
    %v77 = vrcp.pop 32.0
    %v78 = vmul.f32 %v73, %v77
    %v79 = vmul.f32 %v76, %v77
    %v80 = vsub.f32 %v68, %v78
    %v81 = vsub.f32 %v69, %v79
    %v82 = vmul.f32 %v80, %v80
    %v83 = vmul.f32 %v81, %v81
    %v84 = vsel %vm70, %v82, 0.0
    %85 = vadd.xlane.f32.xlu0 %v84
    %v86 = vpop.xlane.xlu0 %85
    %v87 = vsel %vm70, %v83, 0.0
    %88 = vadd.xlane.f32.xlu0 %v87
    %v89 = vpop.xlane.xlu0 %88
    %v90 = vmul.f32 %v86, %v77
    %v91 = vmul.f32 %v89, %v77
    %v92 = vadd.f32 %v90, 1e-05
    %v93 = vadd.f32 %v91, 1e-05
    %v94 = vrsqrt.pop %v92
    %v95 = vmul.f32 %v92, %v94
    %vm96 = vcmp.eq.f32.partialorder %v92, inf
    %v97 = vsel %vm96, %v92, %v95
    %vm98 = vcmp.eq.f32.partialorder %v92, 0.0
    %v99 = vand.u32 %v92, 2147483648
    %v100 = vsel %vm98, %v99, %v97
    %v101 = vrsqrt.pop %v93
    %v102 = vmul.f32 %v93, %v101
    %vm103 = vcmp.eq.f32.partialorder %v93, inf
    %v104 = vsel %vm103, %v93, %v102
    %vm105 = vcmp.eq.f32.partialorder %v93, 0.0
    %v106 = vand.u32 %v93, 2147483648
    %v107 = vsel %vm105, %v106, %v104
    %v108 = vrcp.pop %v100
    %v109 = vmul.f32 %v80, %v108
    %v110 = vrcp.pop %v107
    %v111 = vmul.f32 %v81, %v110
    %v112 = vld [vmem:[%s1] sm:$0x1]
    %v114 = vlaneseq
    %v115 = vshrl.u32 %v114, 7
    %v116 = vsub.s32 0, %v115
    %v117 = vrot.slane %v112, %v116
    %v119 = vmul.f32 %v109, %v117
    %v120 = vmul.f32 %v111, %v117
    %v121 = vld [vmem:[%s2] sm:$0x1]
    %v123 = vlaneseq
    %v124 = vshrl.u32 %v123, 7
    %v125 = vsub.s32 0, %v124
    %v126 = vrot.slane %v121, %v125
    %v128 = vadd.f32 %v119, %v126
    %v129 = vadd.f32 %v120, %v126
    %v130 = vld [vmem:[#allocation5] sm:$0xff]
    %v131 = vld [vmem:[#allocation5 + $0x8] sm:$0xff]
    %v132 = vld [vmem:[#allocation5 + $0x10] sm:$0xff]
    %v133 = vld [vmem:[#allocation5 + $0x18] sm:$0xff]
    %v134 = vld [vmem:[%s4] sm:$0x1]
    %v136 = vlaneseq
    %v137 = vshrl.u32 %v136, 7
    %v138 = vsub.s32 0, %v137
    %v139 = vrot.slane %v134, %v138
    %v142 = vsel %vm70, %v128, 0
    %v145 = vsel %vm70, %v129, 0
    %147 = vmatprep.subr.mxu0 0.0
    %148 = vmatpush1.msra.mxu0 0.0
    %149 = vmatprep.subr.mxu0 0.0
    %150 = vmatpush1.msra.mxu0 0.0
    %151 = vmatprep.subr.mxu0 0.0
    %152 = vmatpush1.msra.mxu0 0.0
    %153 = vmatprep.subr.mxu0 0.0
    %154 = vmatpush1.msra.mxu0 0.0
    %155 = vmatprep.subr.mxu0 0.0
    %156 = vmatpush1.msra.mxu0 0.0
    %157 = vmatprep.subr.mxu0 0.0
    %158 = vmatpush1.msra.mxu0 0.0
    %159 = vmatprep.subr.mxu0 0.0
    %160 = vmatpush1.msra.mxu0 0.0
    %161 = vmatprep.subr.mxu0 0.0
    %162 = vmatpush1.msra.mxu0 0.0
    %163 = vmatprep.subr.mxu0 0.0
    %164 = vmatpush1.msra.mxu0 0.0
    %165 = vmatprep.subr.mxu0 0.0
    %166 = vmatpush1.msra.mxu0 0.0
    %167 = vmatprep.subr.mxu0 0.0
    %168 = vmatpush1.msra.mxu0 0.0
    %169 = vmatprep.subr.mxu0 0.0
    %170 = vmatpush1.msra.mxu0 0.0
    %171 = vmatprep.subr.mxu0 0.0
    %172 = vmatpush1.msra.mxu0 %v133
    %173 = vmatprep.subr.mxu0 0.0
    %174 = vmatpush1.msra.mxu0 %v132
    %175 = vmatprep.subr.mxu0 0.0
    %176 = vmatpush1.msra.mxu0 %v131
    %177 = vmatprep.subr.mxu0 0.0
    %178 = vmatpush1.msra.mxu0 %v130
    %179 = vmatprep.subr.mxu0 0.0
    %180 = vmatpush2.msra.mxu0 0.0
    %181 = vmatprep.subr.mxu0 0.0
    %182 = vmatpush2.msra.mxu0 0.0
    %183 = vmatprep.subr.mxu0 0.0
    %184 = vmatpush2.msra.mxu0 0.0
    %185 = vmatprep.subr.mxu0 0.0
    %186 = vmatpush2.msra.mxu0 0.0
    %187 = vmatprep.subr.mxu0 0.0
    %188 = vmatpush2.msra.mxu0 0.0
    %189 = vmatprep.subr.mxu0 0.0
    %190 = vmatpush2.msra.mxu0 0.0
    %191 = vmatprep.subr.mxu0 0.0
    %192 = vmatpush2.msra.mxu0 0.0
    %193 = vmatprep.subr.mxu0 0.0
    %194 = vmatpush2.msra.mxu0 0.0
    %195 = vmatprep.subr.mxu0 0.0
    %196 = vmatpush2.msra.mxu0 0.0
    %197 = vmatprep.subr.mxu0 0.0
    %198 = vmatpush2.msra.mxu0 0.0
    %199 = vmatprep.subr.mxu0 0.0
    %200 = vmatpush2.msra.mxu0 0.0
    %201 = vmatprep.subr.mxu0 0.0
    %202 = vmatpush2.msra.mxu0 0.0
    %203 = vmatprep.subr.mxu0 0.0
    %204 = vmatpush2.msra.mxu0 0.0
    %205 = vmatprep.subr.mxu0 0.0
    %206 = vmatpush2.msra.mxu0 0.0
    %207 = vmatprep.subr.mxu0 0.0
    %208 = vmatpush2.msra.mxu0 0.0
    %209 = vmatprep.subr.mxu0 0.0
    %210 = vmatpush2.msra.mxu0 0.0
    %211 = vmatprep.mubr.f32.mxu0 0.0
    %212 = vmatmul.mubr.f32.gmra.mxu0 %v142
    %v213 = vpop.f32.mrf.mxu0
    %v214 = vadd.f32 %v139, %v213
    %v215 = vpop.f32.mrf.mxu0
    %216 = vmatprep.mubr.f32.mxu0 0.0
    %217 = vmatmul.mubr.f32.gmra.mxu0 %v145
    %v218 = vpop.f32.mrf.mxu0
    %v219 = vadd.f32 %v139, %v218
    %v220 = vpop.f32.mrf.mxu0
    %221 = vdwg.mxu0
    %v222 = vmul.f32 %v214, 0.35355338
    %v223 = vmul.f32 %v219, 0.35355338
    %225 = vrot.lane.b32.xlu0 %v214, 96
    %v226 = vpop.permute.xlu0 %225
    %vm227 = vcmask 64512
    %v229 = vsel %vm227, %v222, 0
    %v231 = vsel %vm227, %v226, 0
    %233 = vmatprep.subr.mxu0 0.0
    %234 = vmatpush1.xpose.msra.mxu0 0.0
    %235 = vmatprep.subr.mxu0 0.0
    %236 = vmatpush1.xpose.msra.mxu0 0.0
    %237 = vmatprep.subr.mxu0 0.0
    %238 = vmatpush1.xpose.msra.mxu0 0.0
    %239 = vmatprep.subr.mxu0 0.0
    %240 = vmatpush1.xpose.msra.mxu0 0.0
    %241 = vmatprep.subr.mxu0 0.0
    %242 = vmatpush1.xpose.msra.mxu0 0.0
    %243 = vmatprep.subr.mxu0 0.0
    %244 = vmatpush1.xpose.msra.mxu0 0.0
    %245 = vmatprep.subr.mxu0 0.0
    %246 = vmatpush1.xpose.msra.mxu0 0.0
    %247 = vmatprep.subr.mxu0 0.0
    %248 = vmatpush1.xpose.msra.mxu0 0.0
    %249 = vmatprep.subr.mxu0 0.0
    %250 = vmatpush1.xpose.msra.mxu0 0.0
    %251 = vmatprep.subr.mxu0 0.0
    %252 = vmatpush1.xpose.msra.mxu0 0.0
    %253 = vmatprep.subr.mxu0 0.0
    %254 = vmatpush1.xpose.msra.mxu0 0.0
    %255 = vmatprep.subr.mxu0 0.0
    %256 = vmatpush1.xpose.msra.mxu0 0.0
    %257 = vmatprep.subr.mxu0 0.0
    %258 = vmatpush1.xpose.msra.mxu0 0.0
    %259 = vmatprep.subr.mxu0 0.0
    %260 = vmatpush1.xpose.msra.mxu0 0.0
    %261 = vmatprep.subr.mxu0 0.0
    %262 = vmatpush1.xpose.msra.mxu0 0.0
    %263 = vmatprep.subr.mxu0 0.0
    %264 = vmatpush1.xpose.msra.mxu0 %v231
    %265 = vmatprep.subr.mxu0 0.0
    %266 = vmatpush2.xpose.msra.mxu0 0.0
    %267 = vmatprep.subr.mxu0 0.0
    %268 = vmatpush2.xpose.msra.mxu0 0.0
    %269 = vmatprep.subr.mxu0 0.0
    %270 = vmatpush2.xpose.msra.mxu0 0.0
    %271 = vmatprep.subr.mxu0 0.0
    %272 = vmatpush2.xpose.msra.mxu0 0.0
    %273 = vmatprep.subr.mxu0 0.0
    %274 = vmatpush2.xpose.msra.mxu0 0.0
    %275 = vmatprep.subr.mxu0 0.0
    %276 = vmatpush2.xpose.msra.mxu0 0.0
    %277 = vmatprep.subr.mxu0 0.0
    %278 = vmatpush2.xpose.msra.mxu0 0.0
    %279 = vmatprep.subr.mxu0 0.0
    %280 = vmatpush2.xpose.msra.mxu0 0.0
    %281 = vmatprep.subr.mxu0 0.0
    %282 = vmatpush2.xpose.msra.mxu0 0.0
    %283 = vmatprep.subr.mxu0 0.0
    %284 = vmatpush2.xpose.msra.mxu0 0.0
    %285 = vmatprep.subr.mxu0 0.0
    %286 = vmatpush2.xpose.msra.mxu0 0.0
    %287 = vmatprep.subr.mxu0 0.0
    %288 = vmatpush2.xpose.msra.mxu0 0.0
    %289 = vmatprep.subr.mxu0 0.0
    %290 = vmatpush2.xpose.msra.mxu0 0.0
    %291 = vmatprep.subr.mxu0 0.0
    %292 = vmatpush2.xpose.msra.mxu0 0.0
    %293 = vmatprep.subr.mxu0 0.0
    %294 = vmatpush2.xpose.msra.mxu0 0.0
    %295 = vmatprep.subr.mxu0 0.0
    %296 = vmatpush2.xpose.msra.mxu0 0.0
    %297 = vmatprep.mubr.f32.mxu0 0.0
    %298 = vmatmul.mubr.f32.gmra.mxu0 %v229
    %v299 = vpop.f32.mrf.mxu0
    %v300 = vadd.f32 0.0, %v299
    %v301 = vpop.f32.mrf.mxu0
    %302 = vdwg.mxu0
    %304 = vrot.lane.b32.xlu0 %v219, 96
    %v305 = vpop.permute.xlu0 %304
    %v307 = vsel %vm227, %v223, 0
    %v309 = vsel %vm227, %v305, 0
    %311 = vmatprep.subr.mxu0 0.0
    %312 = vmatpush1.xpose.msra.mxu0 0.0
    %313 = vmatprep.subr.mxu0 0.0
    %314 = vmatpush1.xpose.msra.mxu0 0.0
    %315 = vmatprep.subr.mxu0 0.0
    %316 = vmatpush1.xpose.msra.mxu0 0.0
    %317 = vmatprep.subr.mxu0 0.0
    %318 = vmatpush1.xpose.msra.mxu0 0.0
    %319 = vmatprep.subr.mxu0 0.0
    %320 = vmatpush1.xpose.msra.mxu0 0.0
    %321 = vmatprep.subr.mxu0 0.0
    %322 = vmatpush1.xpose.msra.mxu0 0.0
    %323 = vmatprep.subr.mxu0 0.0
    %324 = vmatpush1.xpose.msra.mxu0 0.0
    %325 = vmatprep.subr.mxu0 0.0
    %326 = vmatpush1.xpose.msra.mxu0 0.0
    %327 = vmatprep.subr.mxu0 0.0
    %328 = vmatpush1.xpose.msra.mxu0 0.0
    %329 = vmatprep.subr.mxu0 0.0
    %330 = vmatpush1.xpose.msra.mxu0 0.0
    %331 = vmatprep.subr.mxu0 0.0
    %332 = vmatpush1.xpose.msra.mxu0 0.0
    %333 = vmatprep.subr.mxu0 0.0
    %334 = vmatpush1.xpose.msra.mxu0 0.0
    %335 = vmatprep.subr.mxu0 0.0
    %336 = vmatpush1.xpose.msra.mxu0 0.0
    %337 = vmatprep.subr.mxu0 0.0
    %338 = vmatpush1.xpose.msra.mxu0 0.0
    %339 = vmatprep.subr.mxu0 0.0
    %340 = vmatpush1.xpose.msra.mxu0 0.0
    %341 = vmatprep.subr.mxu0 0.0
    %342 = vmatpush1.xpose.msra.mxu0 %v309
    %343 = vmatprep.subr.mxu0 0.0
    %344 = vmatpush2.xpose.msra.mxu0 0.0
    %345 = vmatprep.subr.mxu0 0.0
    %346 = vmatpush2.xpose.msra.mxu0 0.0
    %347 = vmatprep.subr.mxu0 0.0
    %348 = vmatpush2.xpose.msra.mxu0 0.0
    %349 = vmatprep.subr.mxu0 0.0
    %350 = vmatpush2.xpose.msra.mxu0 0.0
    %351 = vmatprep.subr.mxu0 0.0
    %352 = vmatpush2.xpose.msra.mxu0 0.0
    %353 = vmatprep.subr.mxu0 0.0
    %354 = vmatpush2.xpose.msra.mxu0 0.0
    %355 = vmatprep.subr.mxu0 0.0
    %356 = vmatpush2.xpose.msra.mxu0 0.0
    %357 = vmatprep.subr.mxu0 0.0
    %358 = vmatpush2.xpose.msra.mxu0 0.0
    %359 = vmatprep.subr.mxu0 0.0
    %360 = vmatpush2.xpose.msra.mxu0 0.0
    %361 = vmatprep.subr.mxu0 0.0
    %362 = vmatpush2.xpose.msra.mxu0 0.0
    %363 = vmatprep.subr.mxu0 0.0
    %364 = vmatpush2.xpose.msra.mxu0 0.0
    %365 = vmatprep.subr.mxu0 0.0
    %366 = vmatpush2.xpose.msra.mxu0 0.0
    %367 = vmatprep.subr.mxu0 0.0
    %368 = vmatpush2.xpose.msra.mxu0 0.0
    %369 = vmatprep.subr.mxu0 0.0
    %370 = vmatpush2.xpose.msra.mxu0 0.0
    %371 = vmatprep.subr.mxu0 0.0
    %372 = vmatpush2.xpose.msra.mxu0 0.0
    %373 = vmatprep.subr.mxu0 0.0
    %374 = vmatpush2.xpose.msra.mxu0 0.0
    %375 = vmatprep.mubr.f32.mxu0 0.0
    %376 = vmatmul.mubr.f32.gmra.mxu0 %v307
    %v377 = vpop.f32.mrf.mxu0
    %v378 = vadd.f32 0.0, %v377
    %v379 = vpop.f32.mrf.mxu0
    %380 = vdwg.mxu0
    %v381 = vsel %vm227, %v300, -inf
    %382 = vmax.xlane.f32.xlu0 %v381
    %v383 = vpop.xlane.xlu0 %382
    %v384 = vsel %vm227, %v378, -inf
    %385 = vmax.xlane.f32.xlu0 %v384
    %v386 = vpop.xlane.xlu0 %385
    %v387 = vsub.f32 %v300, %v383
    %v388 = vsub.f32 %v378, %v386
    %v389 = vmul.f32 %v387, 1.442695
    %v390 = vpow.pop %v389
    %v391 = vmul.f32 %v388, 1.442695
    %v392 = vpow.pop %v391
    %v393 = vsel %vm227, %v390, 0.0
    %394 = vadd.xlane.f32.xlu0 %v393
    %v395 = vpop.xlane.xlu0 %394
    %v396 = vsel %vm227, %v392, 0.0
    %397 = vadd.xlane.f32.xlu0 %v396
    %v398 = vpop.xlane.xlu0 %397
    %v399 = vrcp.pop %v395
    %v400 = vmul.f32 %v390, %v399
    %v401 = vrcp.pop %v398
    %v402 = vmul.f32 %v392, %v401
    %403 = vrot.lane.b32.xlu0 %v214, 64
    %v404 = vpop.permute.xlu0 %403
    %v407 = vsel %vm227, %v400, 0
    %409 = vmatprep.subr.mxu0 0.0
    %410 = vmatpush1.msra.mxu0 0.0
    %411 = vmatprep.subr.mxu0 0.0
    %412 = vmatpush1.msra.mxu0 0.0
    %413 = vmatprep.subr.mxu0 0.0
    %414 = vmatpush1.msra.mxu0 0.0
    %415 = vmatprep.subr.mxu0 0.0
    %416 = vmatpush1.msra.mxu0 0.0
    %417 = vmatprep.subr.mxu0 0.0
    %418 = vmatpush1.msra.mxu0 0.0
    %419 = vmatprep.subr.mxu0 0.0
    %420 = vmatpush1.msra.mxu0 0.0
    %421 = vmatprep.subr.mxu0 0.0
    %422 = vmatpush1.msra.mxu0 0.0
    %423 = vmatprep.subr.mxu0 0.0
    %424 = vmatpush1.msra.mxu0 0.0
    %425 = vmatprep.subr.mxu0 0.0
    %426 = vmatpush1.msra.mxu0 0.0
    %427 = vmatprep.subr.mxu0 0.0
    %428 = vmatpush1.msra.mxu0 0.0
    %429 = vmatprep.subr.mxu0 0.0
    %430 = vmatpush1.msra.mxu0 0.0
    %431 = vmatprep.subr.mxu0 0.0
    %432 = vmatpush1.msra.mxu0 0.0
    %433 = vmatprep.subr.mxu0 0.0
    %434 = vmatpush1.msra.mxu0 0.0
    %435 = vmatprep.subr.mxu0 0.0
    %436 = vmatpush1.msra.mxu0 0.0
    %437 = vmatprep.subr.mxu0 0.0
    %438 = vmatpush1.msra.mxu0 0.0
    %439 = vmatprep.subr.mxu0 0.0
    %440 = vmatpush1.msra.mxu0 %v404
    %441 = vmatprep.subr.mxu0 0.0
    %442 = vmatpush2.msra.mxu0 0.0
    %443 = vmatprep.subr.mxu0 0.0
    %444 = vmatpush2.msra.mxu0 0.0
    %445 = vmatprep.subr.mxu0 0.0
    %446 = vmatpush2.msra.mxu0 0.0
    %447 = vmatprep.subr.mxu0 0.0
    %448 = vmatpush2.msra.mxu0 0.0
    %449 = vmatprep.subr.mxu0 0.0
    %450 = vmatpush2.msra.mxu0 0.0
    %451 = vmatprep.subr.mxu0 0.0
    %452 = vmatpush2.msra.mxu0 0.0
    %453 = vmatprep.subr.mxu0 0.0
    %454 = vmatpush2.msra.mxu0 0.0
    %455 = vmatprep.subr.mxu0 0.0
    %456 = vmatpush2.msra.mxu0 0.0
    %457 = vmatprep.subr.mxu0 0.0
    %458 = vmatpush2.msra.mxu0 0.0
    %459 = vmatprep.subr.mxu0 0.0
    %460 = vmatpush2.msra.mxu0 0.0
    %461 = vmatprep.subr.mxu0 0.0
    %462 = vmatpush2.msra.mxu0 0.0
    %463 = vmatprep.subr.mxu0 0.0
    %464 = vmatpush2.msra.mxu0 0.0
    %465 = vmatprep.subr.mxu0 0.0
    %466 = vmatpush2.msra.mxu0 0.0
    %467 = vmatprep.subr.mxu0 0.0
    %468 = vmatpush2.msra.mxu0 0.0
    %469 = vmatprep.subr.mxu0 0.0
    %470 = vmatpush2.msra.mxu0 0.0
    %471 = vmatprep.subr.mxu0 0.0
    %472 = vmatpush2.msra.mxu0 0.0
    %473 = vmatprep.mubr.f32.mxu0 0.0
    %474 = vmatmul.mubr.f32.gmra.mxu0 %v407
    %v475 = vpop.f32.mrf.mxu0
    %v476 = vadd.f32 0.0, %v475
    %v477 = vpop.f32.mrf.mxu0
    %478 = vdwg.mxu0
    %479 = vrot.lane.b32.xlu0 %v219, 64
    %v480 = vpop.permute.xlu0 %479
    %v483 = vsel %vm227, %v402, 0
    %485 = vmatprep.subr.mxu0 0.0
    %486 = vmatpush1.msra.mxu0 0.0
    %487 = vmatprep.subr.mxu0 0.0
    %488 = vmatpush1.msra.mxu0 0.0
    %489 = vmatprep.subr.mxu0 0.0
    %490 = vmatpush1.msra.mxu0 0.0
    %491 = vmatprep.subr.mxu0 0.0
    %492 = vmatpush1.msra.mxu0 0.0
    %493 = vmatprep.subr.mxu0 0.0
    %494 = vmatpush1.msra.mxu0 0.0
    %495 = vmatprep.subr.mxu0 0.0
    %496 = vmatpush1.msra.mxu0 0.0
    %497 = vmatprep.subr.mxu0 0.0
    %498 = vmatpush1.msra.mxu0 0.0
    %499 = vmatprep.subr.mxu0 0.0
    %500 = vmatpush1.msra.mxu0 0.0
    %501 = vmatprep.subr.mxu0 0.0
    %502 = vmatpush1.msra.mxu0 0.0
    %503 = vmatprep.subr.mxu0 0.0
    %504 = vmatpush1.msra.mxu0 0.0
    %505 = vmatprep.subr.mxu0 0.0
    %506 = vmatpush1.msra.mxu0 0.0
    %507 = vmatprep.subr.mxu0 0.0
    %508 = vmatpush1.msra.mxu0 0.0
    %509 = vmatprep.subr.mxu0 0.0
    %510 = vmatpush1.msra.mxu0 0.0
    %511 = vmatprep.subr.mxu0 0.0
    %512 = vmatpush1.msra.mxu0 0.0
    %513 = vmatprep.subr.mxu0 0.0
    %514 = vmatpush1.msra.mxu0 0.0
    %515 = vmatprep.subr.mxu0 0.0
    %516 = vmatpush1.msra.mxu0 %v480
    %517 = vmatprep.subr.mxu0 0.0
    %518 = vmatpush2.msra.mxu0 0.0
    %519 = vmatprep.subr.mxu0 0.0
    %520 = vmatpush2.msra.mxu0 0.0
    %521 = vmatprep.subr.mxu0 0.0
    %522 = vmatpush2.msra.mxu0 0.0
    %523 = vmatprep.subr.mxu0 0.0
    %524 = vmatpush2.msra.mxu0 0.0
    %525 = vmatprep.subr.mxu0 0.0
    %526 = vmatpush2.msra.mxu0 0.0
    %527 = vmatprep.subr.mxu0 0.0
    %528 = vmatpush2.msra.mxu0 0.0
    %529 = vmatprep.subr.mxu0 0.0
    %530 = vmatpush2.msra.mxu0 0.0
    %531 = vmatprep.subr.mxu0 0.0
    %532 = vmatpush2.msra.mxu0 0.0
    %533 = vmatprep.subr.mxu0 0.0
    %534 = vmatpush2.msra.mxu0 0.0
    %535 = vmatprep.subr.mxu0 0.0
    %536 = vmatpush2.msra.mxu0 0.0
    %537 = vmatprep.subr.mxu0 0.0
    %538 = vmatpush2.msra.mxu0 0.0
    %539 = vmatprep.subr.mxu0 0.0
    %540 = vmatpush2.msra.mxu0 0.0
    %541 = vmatprep.subr.mxu0 0.0
    %542 = vmatpush2.msra.mxu0 0.0
    %543 = vmatprep.subr.mxu0 0.0
    %544 = vmatpush2.msra.mxu0 0.0
    %545 = vmatprep.subr.mxu0 0.0
    %546 = vmatpush2.msra.mxu0 0.0
    %547 = vmatprep.subr.mxu0 0.0
    %548 = vmatpush2.msra.mxu0 0.0
    %549 = vmatprep.mubr.f32.mxu0 0.0
    %550 = vmatmul.mubr.f32.gmra.mxu0 %v483
    %v551 = vpop.f32.mrf.mxu0
    %v552 = vadd.f32 0.0, %v551
    %v553 = vpop.f32.mrf.mxu0
    %554 = vdwg.mxu0
    %555 = vrot.lane.b32.xlu0 %v222, 120
    %v556 = vpop.permute.xlu0 %555
    %557 = vrot.lane.b32.xlu0 %v214, 88
    %v558 = vpop.permute.xlu0 %557
    %v559 = vsel %vm227, %v556, 0
    %v561 = vsel %vm227, %v558, 0
    %563 = vmatprep.subr.mxu0 0.0
    %564 = vmatpush1.xpose.msra.mxu0 0.0
    %565 = vmatprep.subr.mxu0 0.0
    %566 = vmatpush1.xpose.msra.mxu0 0.0
    %567 = vmatprep.subr.mxu0 0.0
    %568 = vmatpush1.xpose.msra.mxu0 0.0
    %569 = vmatprep.subr.mxu0 0.0
    %570 = vmatpush1.xpose.msra.mxu0 0.0
    %571 = vmatprep.subr.mxu0 0.0
    %572 = vmatpush1.xpose.msra.mxu0 0.0
    %573 = vmatprep.subr.mxu0 0.0
    %574 = vmatpush1.xpose.msra.mxu0 0.0
    %575 = vmatprep.subr.mxu0 0.0
    %576 = vmatpush1.xpose.msra.mxu0 0.0
    %577 = vmatprep.subr.mxu0 0.0
    %578 = vmatpush1.xpose.msra.mxu0 0.0
    %579 = vmatprep.subr.mxu0 0.0
    %580 = vmatpush1.xpose.msra.mxu0 0.0
    %581 = vmatprep.subr.mxu0 0.0
    %582 = vmatpush1.xpose.msra.mxu0 0.0
    %583 = vmatprep.subr.mxu0 0.0
    %584 = vmatpush1.xpose.msra.mxu0 0.0
    %585 = vmatprep.subr.mxu0 0.0
    %586 = vmatpush1.xpose.msra.mxu0 0.0
    %587 = vmatprep.subr.mxu0 0.0
    %588 = vmatpush1.xpose.msra.mxu0 0.0
    %589 = vmatprep.subr.mxu0 0.0
    %590 = vmatpush1.xpose.msra.mxu0 0.0
    %591 = vmatprep.subr.mxu0 0.0
    %592 = vmatpush1.xpose.msra.mxu0 0.0
    %593 = vmatprep.subr.mxu0 0.0
    %594 = vmatpush1.xpose.msra.mxu0 %v561
    %595 = vmatprep.subr.mxu0 0.0
    %596 = vmatpush2.xpose.msra.mxu0 0.0
    %597 = vmatprep.subr.mxu0 0.0
    %598 = vmatpush2.xpose.msra.mxu0 0.0
    %599 = vmatprep.subr.mxu0 0.0
    %600 = vmatpush2.xpose.msra.mxu0 0.0
    %601 = vmatprep.subr.mxu0 0.0
    %602 = vmatpush2.xpose.msra.mxu0 0.0
    %603 = vmatprep.subr.mxu0 0.0
    %604 = vmatpush2.xpose.msra.mxu0 0.0
    %605 = vmatprep.subr.mxu0 0.0
    %606 = vmatpush2.xpose.msra.mxu0 0.0
    %607 = vmatprep.subr.mxu0 0.0
    %608 = vmatpush2.xpose.msra.mxu0 0.0
    %609 = vmatprep.subr.mxu0 0.0
    %610 = vmatpush2.xpose.msra.mxu0 0.0
    %611 = vmatprep.subr.mxu0 0.0
    %612 = vmatpush2.xpose.msra.mxu0 0.0
    %613 = vmatprep.subr.mxu0 0.0
    %614 = vmatpush2.xpose.msra.mxu0 0.0
    %615 = vmatprep.subr.mxu0 0.0
    %616 = vmatpush2.xpose.msra.mxu0 0.0
    %617 = vmatprep.subr.mxu0 0.0
    %618 = vmatpush2.xpose.msra.mxu0 0.0
    %619 = vmatprep.subr.mxu0 0.0
    %620 = vmatpush2.xpose.msra.mxu0 0.0
    %621 = vmatprep.subr.mxu0 0.0
    %622 = vmatpush2.xpose.msra.mxu0 0.0
    %623 = vmatprep.subr.mxu0 0.0
    %624 = vmatpush2.xpose.msra.mxu0 0.0
    %625 = vmatprep.subr.mxu0 0.0
    %626 = vmatpush2.xpose.msra.mxu0 0.0
    %627 = vmatprep.mubr.f32.mxu0 0.0
    %628 = vmatmul.mubr.f32.gmra.mxu0 %v559
    %v629 = vpop.f32.mrf.mxu0
    %v630 = vadd.f32 0.0, %v629
    %v631 = vpop.f32.mrf.mxu0
    %632 = vdwg.mxu0
    %633 = vrot.lane.b32.xlu0 %v223, 120
    %v634 = vpop.permute.xlu0 %633
    %635 = vrot.lane.b32.xlu0 %v219, 88
    %v636 = vpop.permute.xlu0 %635
    %v637 = vsel %vm227, %v634, 0
    %v639 = vsel %vm227, %v636, 0
    %641 = vmatprep.subr.mxu0 0.0
    %642 = vmatpush1.xpose.msra.mxu0 0.0
    %643 = vmatprep.subr.mxu0 0.0
    %644 = vmatpush1.xpose.msra.mxu0 0.0
    %645 = vmatprep.subr.mxu0 0.0
    %646 = vmatpush1.xpose.msra.mxu0 0.0
    %647 = vmatprep.subr.mxu0 0.0
    %648 = vmatpush1.xpose.msra.mxu0 0.0
    %649 = vmatprep.subr.mxu0 0.0
    %650 = vmatpush1.xpose.msra.mxu0 0.0
    %651 = vmatprep.subr.mxu0 0.0
    %652 = vmatpush1.xpose.msra.mxu0 0.0
    %653 = vmatprep.subr.mxu0 0.0
    %654 = vmatpush1.xpose.msra.mxu0 0.0
    %655 = vmatprep.subr.mxu0 0.0
    %656 = vmatpush1.xpose.msra.mxu0 0.0
    %657 = vmatprep.subr.mxu0 0.0
    %658 = vmatpush1.xpose.msra.mxu0 0.0
    %659 = vmatprep.subr.mxu0 0.0
    %660 = vmatpush1.xpose.msra.mxu0 0.0
    %661 = vmatprep.subr.mxu0 0.0
    %662 = vmatpush1.xpose.msra.mxu0 0.0
    %663 = vmatprep.subr.mxu0 0.0
    %664 = vmatpush1.xpose.msra.mxu0 0.0
    %665 = vmatprep.subr.mxu0 0.0
    %666 = vmatpush1.xpose.msra.mxu0 0.0
    %667 = vmatprep.subr.mxu0 0.0
    %668 = vmatpush1.xpose.msra.mxu0 0.0
    %669 = vmatprep.subr.mxu0 0.0
    %670 = vmatpush1.xpose.msra.mxu0 0.0
    %671 = vmatprep.subr.mxu0 0.0
    %672 = vmatpush1.xpose.msra.mxu0 %v639
    %673 = vmatprep.subr.mxu0 0.0
    %674 = vmatpush2.xpose.msra.mxu0 0.0
    %675 = vmatprep.subr.mxu0 0.0
    %676 = vmatpush2.xpose.msra.mxu0 0.0
    %677 = vmatprep.subr.mxu0 0.0
    %678 = vmatpush2.xpose.msra.mxu0 0.0
    %679 = vmatprep.subr.mxu0 0.0
    %680 = vmatpush2.xpose.msra.mxu0 0.0
    %681 = vmatprep.subr.mxu0 0.0
    %682 = vmatpush2.xpose.msra.mxu0 0.0
    %683 = vmatprep.subr.mxu0 0.0
    %684 = vmatpush2.xpose.msra.mxu0 0.0
    %685 = vmatprep.subr.mxu0 0.0
    %686 = vmatpush2.xpose.msra.mxu0 0.0
    %687 = vmatprep.subr.mxu0 0.0
    %688 = vmatpush2.xpose.msra.mxu0 0.0
    %689 = vmatprep.subr.mxu0 0.0
    %690 = vmatpush2.xpose.msra.mxu0 0.0
    %691 = vmatprep.subr.mxu0 0.0
    %692 = vmatpush2.xpose.msra.mxu0 0.0
    %693 = vmatprep.subr.mxu0 0.0
    %694 = vmatpush2.xpose.msra.mxu0 0.0
    %695 = vmatprep.subr.mxu0 0.0
    %696 = vmatpush2.xpose.msra.mxu0 0.0
    %697 = vmatprep.subr.mxu0 0.0
    %698 = vmatpush2.xpose.msra.mxu0 0.0
    %699 = vmatprep.subr.mxu0 0.0
    %700 = vmatpush2.xpose.msra.mxu0 0.0
    %701 = vmatprep.subr.mxu0 0.0
    %702 = vmatpush2.xpose.msra.mxu0 0.0
    %703 = vmatprep.subr.mxu0 0.0
    %704 = vmatpush2.xpose.msra.mxu0 0.0
    %705 = vmatprep.mubr.f32.mxu0 0.0
    %706 = vmatmul.mubr.f32.gmra.mxu0 %v637
    %v707 = vpop.f32.mrf.mxu0
    %v708 = vadd.f32 0.0, %v707
    %v709 = vpop.f32.mrf.mxu0
    %710 = vdwg.mxu0
    %v711 = vsel %vm227, %v630, -inf
    %712 = vmax.xlane.f32.xlu0 %v711
    %v713 = vpop.xlane.xlu0 %712
    %v714 = vsel %vm227, %v708, -inf
    %715 = vmax.xlane.f32.xlu0 %v714
    %v716 = vpop.xlane.xlu0 %715
    %v717 = vsub.f32 %v630, %v713
    %v718 = vsub.f32 %v708, %v716
    %v719 = vmul.f32 %v717, 1.442695
    %v720 = vpow.pop %v719
    %v721 = vmul.f32 %v718, 1.442695
    %v722 = vpow.pop %v721
    %v723 = vsel %vm227, %v720, 0.0
    %724 = vadd.xlane.f32.xlu0 %v723
    %v725 = vpop.xlane.xlu0 %724
    %v726 = vsel %vm227, %v722, 0.0
    %727 = vadd.xlane.f32.xlu0 %v726
    %v728 = vpop.xlane.xlu0 %727
    %v729 = vrcp.pop %v725
    %v730 = vmul.f32 %v720, %v729
    %v731 = vrcp.pop %v728
    %v732 = vmul.f32 %v722, %v731
    %733 = vrot.lane.b32.xlu0 %v214, 56
    %v734 = vpop.permute.xlu0 %733
    %v737 = vsel %vm227, %v730, 0
    %739 = vmatprep.subr.mxu0 0.0
    %740 = vmatpush1.msra.mxu0 0.0
    %741 = vmatprep.subr.mxu0 0.0
    %742 = vmatpush1.msra.mxu0 0.0
    %743 = vmatprep.subr.mxu0 0.0
    %744 = vmatpush1.msra.mxu0 0.0
    %745 = vmatprep.subr.mxu0 0.0
    %746 = vmatpush1.msra.mxu0 0.0
    %747 = vmatprep.subr.mxu0 0.0
    %748 = vmatpush1.msra.mxu0 0.0
    %749 = vmatprep.subr.mxu0 0.0
    %750 = vmatpush1.msra.mxu0 0.0
    %751 = vmatprep.subr.mxu0 0.0
    %752 = vmatpush1.msra.mxu0 0.0
    %753 = vmatprep.subr.mxu0 0.0
    %754 = vmatpush1.msra.mxu0 0.0
    %755 = vmatprep.subr.mxu0 0.0
    %756 = vmatpush1.msra.mxu0 0.0
    %757 = vmatprep.subr.mxu0 0.0
    %758 = vmatpush1.msra.mxu0 0.0
    %759 = vmatprep.subr.mxu0 0.0
    %760 = vmatpush1.msra.mxu0 0.0
    %761 = vmatprep.subr.mxu0 0.0
    %762 = vmatpush1.msra.mxu0 0.0
    %763 = vmatprep.subr.mxu0 0.0
    %764 = vmatpush1.msra.mxu0 0.0
    %765 = vmatprep.subr.mxu0 0.0
    %766 = vmatpush1.msra.mxu0 0.0
    %767 = vmatprep.subr.mxu0 0.0
    %768 = vmatpush1.msra.mxu0 0.0
    %769 = vmatprep.subr.mxu0 0.0
    %770 = vmatpush1.msra.mxu0 %v734
    %771 = vmatprep.subr.mxu0 0.0
    %772 = vmatpush2.msra.mxu0 0.0
    %773 = vmatprep.subr.mxu0 0.0
    %774 = vmatpush2.msra.mxu0 0.0
    %775 = vmatprep.subr.mxu0 0.0
    %776 = vmatpush2.msra.mxu0 0.0
    %777 = vmatprep.subr.mxu0 0.0
    %778 = vmatpush2.msra.mxu0 0.0
    %779 = vmatprep.subr.mxu0 0.0
    %780 = vmatpush2.msra.mxu0 0.0
    %781 = vmatprep.subr.mxu0 0.0
    %782 = vmatpush2.msra.mxu0 0.0
    %783 = vmatprep.subr.mxu0 0.0
    %784 = vmatpush2.msra.mxu0 0.0
    %785 = vmatprep.subr.mxu0 0.0
    %786 = vmatpush2.msra.mxu0 0.0
    %787 = vmatprep.subr.mxu0 0.0
    %788 = vmatpush2.msra.mxu0 0.0
    %789 = vmatprep.subr.mxu0 0.0
    %790 = vmatpush2.msra.mxu0 0.0
    %791 = vmatprep.subr.mxu0 0.0
    %792 = vmatpush2.msra.mxu0 0.0
    %793 = vmatprep.subr.mxu0 0.0
    %794 = vmatpush2.msra.mxu0 0.0
    %795 = vmatprep.subr.mxu0 0.0
    %796 = vmatpush2.msra.mxu0 0.0
    %797 = vmatprep.subr.mxu0 0.0
    %798 = vmatpush2.msra.mxu0 0.0
    %799 = vmatprep.subr.mxu0 0.0
    %800 = vmatpush2.msra.mxu0 0.0
    %801 = vmatprep.subr.mxu0 0.0
    %802 = vmatpush2.msra.mxu0 0.0
    %803 = vmatprep.mubr.f32.mxu0 0.0
    %804 = vmatmul.mubr.f32.gmra.mxu0 %v737
    %v805 = vpop.f32.mrf.mxu0
    %v806 = vadd.f32 0.0, %v805
    %v807 = vpop.f32.mrf.mxu0
    %808 = vdwg.mxu0
    %809 = vrot.lane.b32.xlu0 %v219, 56
    %v810 = vpop.permute.xlu0 %809
    %v813 = vsel %vm227, %v732, 0
    %815 = vmatprep.subr.mxu0 0.0
    %816 = vmatpush1.msra.mxu0 0.0
    %817 = vmatprep.subr.mxu0 0.0
    %818 = vmatpush1.msra.mxu0 0.0
    %819 = vmatprep.subr.mxu0 0.0
    %820 = vmatpush1.msra.mxu0 0.0
    %821 = vmatprep.subr.mxu0 0.0
    %822 = vmatpush1.msra.mxu0 0.0
    %823 = vmatprep.subr.mxu0 0.0
    %824 = vmatpush1.msra.mxu0 0.0
    %825 = vmatprep.subr.mxu0 0.0
    %826 = vmatpush1.msra.mxu0 0.0
    %827 = vmatprep.subr.mxu0 0.0
    %828 = vmatpush1.msra.mxu0 0.0
    %829 = vmatprep.subr.mxu0 0.0
    %830 = vmatpush1.msra.mxu0 0.0
    %831 = vmatprep.subr.mxu0 0.0
    %832 = vmatpush1.msra.mxu0 0.0
    %833 = vmatprep.subr.mxu0 0.0
    %834 = vmatpush1.msra.mxu0 0.0
    %835 = vmatprep.subr.mxu0 0.0
    %836 = vmatpush1.msra.mxu0 0.0
    %837 = vmatprep.subr.mxu0 0.0
    %838 = vmatpush1.msra.mxu0 0.0
    %839 = vmatprep.subr.mxu0 0.0
    %840 = vmatpush1.msra.mxu0 0.0
    %841 = vmatprep.subr.mxu0 0.0
    %842 = vmatpush1.msra.mxu0 0.0
    %843 = vmatprep.subr.mxu0 0.0
    %844 = vmatpush1.msra.mxu0 0.0
    %845 = vmatprep.subr.mxu0 0.0
    %846 = vmatpush1.msra.mxu0 %v810
    %847 = vmatprep.subr.mxu0 0.0
    %848 = vmatpush2.msra.mxu0 0.0
    %849 = vmatprep.subr.mxu0 0.0
    %850 = vmatpush2.msra.mxu0 0.0
    %851 = vmatprep.subr.mxu0 0.0
    %852 = vmatpush2.msra.mxu0 0.0
    %853 = vmatprep.subr.mxu0 0.0
    %854 = vmatpush2.msra.mxu0 0.0
    %855 = vmatprep.subr.mxu0 0.0
    %856 = vmatpush2.msra.mxu0 0.0
    %857 = vmatprep.subr.mxu0 0.0
    %858 = vmatpush2.msra.mxu0 0.0
    %859 = vmatprep.subr.mxu0 0.0
    %860 = vmatpush2.msra.mxu0 0.0
    %861 = vmatprep.subr.mxu0 0.0
    %862 = vmatpush2.msra.mxu0 0.0
    %863 = vmatprep.subr.mxu0 0.0
    %864 = vmatpush2.msra.mxu0 0.0
    %865 = vmatprep.subr.mxu0 0.0
    %866 = vmatpush2.msra.mxu0 0.0
    %867 = vmatprep.subr.mxu0 0.0
    %868 = vmatpush2.msra.mxu0 0.0
    %869 = vmatprep.subr.mxu0 0.0
    %870 = vmatpush2.msra.mxu0 0.0
    %871 = vmatprep.subr.mxu0 0.0
    %872 = vmatpush2.msra.mxu0 0.0
    %873 = vmatprep.subr.mxu0 0.0
    %874 = vmatpush2.msra.mxu0 0.0
    %875 = vmatprep.subr.mxu0 0.0
    %876 = vmatpush2.msra.mxu0 0.0
    %877 = vmatprep.subr.mxu0 0.0
    %878 = vmatpush2.msra.mxu0 0.0
    %879 = vmatprep.mubr.f32.mxu0 0.0
    %880 = vmatmul.mubr.f32.gmra.mxu0 %v813
    %v881 = vpop.f32.mrf.mxu0
    %v882 = vadd.f32 0.0, %v881
    %v883 = vpop.f32.mrf.mxu0
    %884 = vdwg.mxu0
    %885 = vrot.lane.b32.xlu0 %v222, 112
    %v886 = vpop.permute.xlu0 %885
    %887 = vrot.lane.b32.xlu0 %v214, 80
    %v888 = vpop.permute.xlu0 %887
    %v889 = vsel %vm227, %v886, 0
    %v891 = vsel %vm227, %v888, 0
    %893 = vmatprep.subr.mxu0 0.0
    %894 = vmatpush1.xpose.msra.mxu0 0.0
    %895 = vmatprep.subr.mxu0 0.0
    %896 = vmatpush1.xpose.msra.mxu0 0.0
    %897 = vmatprep.subr.mxu0 0.0
    %898 = vmatpush1.xpose.msra.mxu0 0.0
    %899 = vmatprep.subr.mxu0 0.0
    %900 = vmatpush1.xpose.msra.mxu0 0.0
    %901 = vmatprep.subr.mxu0 0.0
    %902 = vmatpush1.xpose.msra.mxu0 0.0
    %903 = vmatprep.subr.mxu0 0.0
    %904 = vmatpush1.xpose.msra.mxu0 0.0
    %905 = vmatprep.subr.mxu0 0.0
    %906 = vmatpush1.xpose.msra.mxu0 0.0
    %907 = vmatprep.subr.mxu0 0.0
    %908 = vmatpush1.xpose.msra.mxu0 0.0
    %909 = vmatprep.subr.mxu0 0.0
    %910 = vmatpush1.xpose.msra.mxu0 0.0
    %911 = vmatprep.subr.mxu0 0.0
    %912 = vmatpush1.xpose.msra.mxu0 0.0
    %913 = vmatprep.subr.mxu0 0.0
    %914 = vmatpush1.xpose.msra.mxu0 0.0
    %915 = vmatprep.subr.mxu0 0.0
    %916 = vmatpush1.xpose.msra.mxu0 0.0
    %917 = vmatprep.subr.mxu0 0.0
    %918 = vmatpush1.xpose.msra.mxu0 0.0
    %919 = vmatprep.subr.mxu0 0.0
    %920 = vmatpush1.xpose.msra.mxu0 0.0
    %921 = vmatprep.subr.mxu0 0.0
    %922 = vmatpush1.xpose.msra.mxu0 0.0
    %923 = vmatprep.subr.mxu0 0.0
    %924 = vmatpush1.xpose.msra.mxu0 %v891
    %925 = vmatprep.subr.mxu0 0.0
    %926 = vmatpush2.xpose.msra.mxu0 0.0
    %927 = vmatprep.subr.mxu0 0.0
    %928 = vmatpush2.xpose.msra.mxu0 0.0
    %929 = vmatprep.subr.mxu0 0.0
    %930 = vmatpush2.xpose.msra.mxu0 0.0
    %931 = vmatprep.subr.mxu0 0.0
    %932 = vmatpush2.xpose.msra.mxu0 0.0
    %933 = vmatprep.subr.mxu0 0.0
    %934 = vmatpush2.xpose.msra.mxu0 0.0
    %935 = vmatprep.subr.mxu0 0.0
    %936 = vmatpush2.xpose.msra.mxu0 0.0
    %937 = vmatprep.subr.mxu0 0.0
    %938 = vmatpush2.xpose.msra.mxu0 0.0
    %939 = vmatprep.subr.mxu0 0.0
    %940 = vmatpush2.xpose.msra.mxu0 0.0
    %941 = vmatprep.subr.mxu0 0.0
    %942 = vmatpush2.xpose.msra.mxu0 0.0
    %943 = vmatprep.subr.mxu0 0.0
    %944 = vmatpush2.xpose.msra.mxu0 0.0
    %945 = vmatprep.subr.mxu0 0.0
    %946 = vmatpush2.xpose.msra.mxu0 0.0
    %947 = vmatprep.subr.mxu0 0.0
    %948 = vmatpush2.xpose.msra.mxu0 0.0
    %949 = vmatprep.subr.mxu0 0.0
    %950 = vmatpush2.xpose.msra.mxu0 0.0
    %951 = vmatprep.subr.mxu0 0.0
    %952 = vmatpush2.xpose.msra.mxu0 0.0
    %953 = vmatprep.subr.mxu0 0.0
    %954 = vmatpush2.xpose.msra.mxu0 0.0
    %955 = vmatprep.subr.mxu0 0.0
    %956 = vmatpush2.xpose.msra.mxu0 0.0
    %957 = vmatprep.mubr.f32.mxu0 0.0
    %958 = vmatmul.mubr.f32.gmra.mxu0 %v889
    %v959 = vpop.f32.mrf.mxu0
    %v960 = vadd.f32 0.0, %v959
    %v961 = vpop.f32.mrf.mxu0
    %962 = vdwg.mxu0
    %963 = vrot.lane.b32.xlu0 %v223, 112
    %v964 = vpop.permute.xlu0 %963
    %965 = vrot.lane.b32.xlu0 %v219, 80
    %v966 = vpop.permute.xlu0 %965
    %v967 = vsel %vm227, %v964, 0
    %v969 = vsel %vm227, %v966, 0
    %971 = vmatprep.subr.mxu0 0.0
    %972 = vmatpush1.xpose.msra.mxu0 0.0
    %973 = vmatprep.subr.mxu0 0.0
    %974 = vmatpush1.xpose.msra.mxu0 0.0
    %975 = vmatprep.subr.mxu0 0.0
    %976 = vmatpush1.xpose.msra.mxu0 0.0
    %977 = vmatprep.subr.mxu0 0.0
    %978 = vmatpush1.xpose.msra.mxu0 0.0
    %979 = vmatprep.subr.mxu0 0.0
    %980 = vmatpush1.xpose.msra.mxu0 0.0
    %981 = vmatprep.subr.mxu0 0.0
    %982 = vmatpush1.xpose.msra.mxu0 0.0
    %983 = vmatprep.subr.mxu0 0.0
    %984 = vmatpush1.xpose.msra.mxu0 0.0
    %985 = vmatprep.subr.mxu0 0.0
    %986 = vmatpush1.xpose.msra.mxu0 0.0
    %987 = vmatprep.subr.mxu0 0.0
    %988 = vmatpush1.xpose.msra.mxu0 0.0
    %989 = vmatprep.subr.mxu0 0.0
    %990 = vmatpush1.xpose.msra.mxu0 0.0
    %991 = vmatprep.subr.mxu0 0.0
    %992 = vmatpush1.xpose.msra.mxu0 0.0
    %993 = vmatprep.subr.mxu0 0.0
    %994 = vmatpush1.xpose.msra.mxu0 0.0
    %995 = vmatprep.subr.mxu0 0.0
    %996 = vmatpush1.xpose.msra.mxu0 0.0
    %997 = vmatprep.subr.mxu0 0.0
    %998 = vmatpush1.xpose.msra.mxu0 0.0
    %999 = vmatprep.subr.mxu0 0.0
    %1000 = vmatpush1.xpose.msra.mxu0 0.0
    %1001 = vmatprep.subr.mxu0 0.0
    %1002 = vmatpush1.xpose.msra.mxu0 %v969
    %1003 = vmatprep.subr.mxu0 0.0
    %1004 = vmatpush2.xpose.msra.mxu0 0.0
    %1005 = vmatprep.subr.mxu0 0.0
    %1006 = vmatpush2.xpose.msra.mxu0 0.0
    %1007 = vmatprep.subr.mxu0 0.0
    %1008 = vmatpush2.xpose.msra.mxu0 0.0
    %1009 = vmatprep.subr.mxu0 0.0
    %1010 = vmatpush2.xpose.msra.mxu0 0.0
    %1011 = vmatprep.subr.mxu0 0.0
    %1012 = vmatpush2.xpose.msra.mxu0 0.0
    %1013 = vmatprep.subr.mxu0 0.0
    %1014 = vmatpush2.xpose.msra.mxu0 0.0
    %1015 = vmatprep.subr.mxu0 0.0
    %1016 = vmatpush2.xpose.msra.mxu0 0.0
    %1017 = vmatprep.subr.mxu0 0.0
    %1018 = vmatpush2.xpose.msra.mxu0 0.0
    %1019 = vmatprep.subr.mxu0 0.0
    %1020 = vmatpush2.xpose.msra.mxu0 0.0
    %1021 = vmatprep.subr.mxu0 0.0
    %1022 = vmatpush2.xpose.msra.mxu0 0.0
    %1023 = vmatprep.subr.mxu0 0.0
    %1024 = vmatpush2.xpose.msra.mxu0 0.0
    %1025 = vmatprep.subr.mxu0 0.0
    %1026 = vmatpush2.xpose.msra.mxu0 0.0
    %1027 = vmatprep.subr.mxu0 0.0
    %1028 = vmatpush2.xpose.msra.mxu0 0.0
    %1029 = vmatprep.subr.mxu0 0.0
    %1030 = vmatpush2.xpose.msra.mxu0 0.0
    %1031 = vmatprep.subr.mxu0 0.0
    %1032 = vmatpush2.xpose.msra.mxu0 0.0
    %1033 = vmatprep.subr.mxu0 0.0
    %1034 = vmatpush2.xpose.msra.mxu0 0.0
    %1035 = vmatprep.mubr.f32.mxu0 0.0
    %1036 = vmatmul.mubr.f32.gmra.mxu0 %v967
    %v1037 = vpop.f32.mrf.mxu0
    %v1038 = vadd.f32 0.0, %v1037
    %v1039 = vpop.f32.mrf.mxu0
    %1040 = vdwg.mxu0
    %v1041 = vsel %vm227, %v960, -inf
    %1042 = vmax.xlane.f32.xlu0 %v1041
    %v1043 = vpop.xlane.xlu0 %1042
    %v1044 = vsel %vm227, %v1038, -inf
    %1045 = vmax.xlane.f32.xlu0 %v1044
    %v1046 = vpop.xlane.xlu0 %1045
    %v1047 = vsub.f32 %v960, %v1043
    %v1048 = vsub.f32 %v1038, %v1046
    %v1049 = vmul.f32 %v1047, 1.442695
    %v1050 = vpow.pop %v1049
    %v1051 = vmul.f32 %v1048, 1.442695
    %v1052 = vpow.pop %v1051
    %v1053 = vsel %vm227, %v1050, 0.0
    %1054 = vadd.xlane.f32.xlu0 %v1053
    %v1055 = vpop.xlane.xlu0 %1054
    %v1056 = vsel %vm227, %v1052, 0.0
    %1057 = vadd.xlane.f32.xlu0 %v1056
    %v1058 = vpop.xlane.xlu0 %1057
    %v1059 = vrcp.pop %v1055
    %v1060 = vmul.f32 %v1050, %v1059
    %v1061 = vrcp.pop %v1058
    %v1062 = vmul.f32 %v1052, %v1061
    %1063 = vrot.lane.b32.xlu0 %v214, 48
    %v1064 = vpop.permute.xlu0 %1063
    %v1067 = vsel %vm227, %v1060, 0
    %1069 = vmatprep.subr.mxu0 0.0
    %1070 = vmatpush1.msra.mxu0 0.0
    %1071 = vmatprep.subr.mxu0 0.0
    %1072 = vmatpush1.msra.mxu0 0.0
    %1073 = vmatprep.subr.mxu0 0.0
    %1074 = vmatpush1.msra.mxu0 0.0
    %1075 = vmatprep.subr.mxu0 0.0
    %1076 = vmatpush1.msra.mxu0 0.0
    %1077 = vmatprep.subr.mxu0 0.0
    %1078 = vmatpush1.msra.mxu0 0.0
    %1079 = vmatprep.subr.mxu0 0.0
    %1080 = vmatpush1.msra.mxu0 0.0
    %1081 = vmatprep.subr.mxu0 0.0
    %1082 = vmatpush1.msra.mxu0 0.0
    %1083 = vmatprep.subr.mxu0 0.0
    %1084 = vmatpush1.msra.mxu0 0.0
    %1085 = vmatprep.subr.mxu0 0.0
    %1086 = vmatpush1.msra.mxu0 0.0
    %1087 = vmatprep.subr.mxu0 0.0
    %1088 = vmatpush1.msra.mxu0 0.0
    %1089 = vmatprep.subr.mxu0 0.0
    %1090 = vmatpush1.msra.mxu0 0.0
    %1091 = vmatprep.subr.mxu0 0.0
    %1092 = vmatpush1.msra.mxu0 0.0
    %1093 = vmatprep.subr.mxu0 0.0
    %1094 = vmatpush1.msra.mxu0 0.0
    %1095 = vmatprep.subr.mxu0 0.0
    %1096 = vmatpush1.msra.mxu0 0.0
    %1097 = vmatprep.subr.mxu0 0.0
    %1098 = vmatpush1.msra.mxu0 0.0
    %1099 = vmatprep.subr.mxu0 0.0
    %1100 = vmatpush1.msra.mxu0 %v1064
    %1101 = vmatprep.subr.mxu0 0.0
    %1102 = vmatpush2.msra.mxu0 0.0
    %1103 = vmatprep.subr.mxu0 0.0
    %1104 = vmatpush2.msra.mxu0 0.0
    %1105 = vmatprep.subr.mxu0 0.0
    %1106 = vmatpush2.msra.mxu0 0.0
    %1107 = vmatprep.subr.mxu0 0.0
    %1108 = vmatpush2.msra.mxu0 0.0
    %1109 = vmatprep.subr.mxu0 0.0
    %1110 = vmatpush2.msra.mxu0 0.0
    %1111 = vmatprep.subr.mxu0 0.0
    %1112 = vmatpush2.msra.mxu0 0.0
    %1113 = vmatprep.subr.mxu0 0.0
    %1114 = vmatpush2.msra.mxu0 0.0
    %1115 = vmatprep.subr.mxu0 0.0
    %1116 = vmatpush2.msra.mxu0 0.0
    %1117 = vmatprep.subr.mxu0 0.0
    %1118 = vmatpush2.msra.mxu0 0.0
    %1119 = vmatprep.subr.mxu0 0.0
    %1120 = vmatpush2.msra.mxu0 0.0
    %1121 = vmatprep.subr.mxu0 0.0
    %1122 = vmatpush2.msra.mxu0 0.0
    %1123 = vmatprep.subr.mxu0 0.0
    %1124 = vmatpush2.msra.mxu0 0.0
    %1125 = vmatprep.subr.mxu0 0.0
    %1126 = vmatpush2.msra.mxu0 0.0
    %1127 = vmatprep.subr.mxu0 0.0
    %1128 = vmatpush2.msra.mxu0 0.0
    %1129 = vmatprep.subr.mxu0 0.0
    %1130 = vmatpush2.msra.mxu0 0.0
    %1131 = vmatprep.subr.mxu0 0.0
    %1132 = vmatpush2.msra.mxu0 0.0
    %1133 = vmatprep.mubr.f32.mxu0 0.0
    %1134 = vmatmul.mubr.f32.gmra.mxu0 %v1067
    %v1135 = vpop.f32.mrf.mxu0
    %v1136 = vadd.f32 0.0, %v1135
    %v1137 = vpop.f32.mrf.mxu0
    %1138 = vdwg.mxu0
    %1139 = vrot.lane.b32.xlu0 %v219, 48
    %v1140 = vpop.permute.xlu0 %1139
    %v1143 = vsel %vm227, %v1062, 0
    %1145 = vmatprep.subr.mxu0 0.0
    %1146 = vmatpush1.msra.mxu0 0.0
    %1147 = vmatprep.subr.mxu0 0.0
    %1148 = vmatpush1.msra.mxu0 0.0
    %1149 = vmatprep.subr.mxu0 0.0
    %1150 = vmatpush1.msra.mxu0 0.0
    %1151 = vmatprep.subr.mxu0 0.0
    %1152 = vmatpush1.msra.mxu0 0.0
    %1153 = vmatprep.subr.mxu0 0.0
    %1154 = vmatpush1.msra.mxu0 0.0
    %1155 = vmatprep.subr.mxu0 0.0
    %1156 = vmatpush1.msra.mxu0 0.0
    %1157 = vmatprep.subr.mxu0 0.0
    %1158 = vmatpush1.msra.mxu0 0.0
    %1159 = vmatprep.subr.mxu0 0.0
    %1160 = vmatpush1.msra.mxu0 0.0
    %1161 = vmatprep.subr.mxu0 0.0
    %1162 = vmatpush1.msra.mxu0 0.0
    %1163 = vmatprep.subr.mxu0 0.0
    %1164 = vmatpush1.msra.mxu0 0.0
    %1165 = vmatprep.subr.mxu0 0.0
    %1166 = vmatpush1.msra.mxu0 0.0
    %1167 = vmatprep.subr.mxu0 0.0
    %1168 = vmatpush1.msra.mxu0 0.0
    %1169 = vmatprep.subr.mxu0 0.0
    %1170 = vmatpush1.msra.mxu0 0.0
    %1171 = vmatprep.subr.mxu0 0.0
    %1172 = vmatpush1.msra.mxu0 0.0
    %1173 = vmatprep.subr.mxu0 0.0
    %1174 = vmatpush1.msra.mxu0 0.0
    %1175 = vmatprep.subr.mxu0 0.0
    %1176 = vmatpush1.msra.mxu0 %v1140
    %1177 = vmatprep.subr.mxu0 0.0
    %1178 = vmatpush2.msra.mxu0 0.0
    %1179 = vmatprep.subr.mxu0 0.0
    %1180 = vmatpush2.msra.mxu0 0.0
    %1181 = vmatprep.subr.mxu0 0.0
    %1182 = vmatpush2.msra.mxu0 0.0
    %1183 = vmatprep.subr.mxu0 0.0
    %1184 = vmatpush2.msra.mxu0 0.0
    %1185 = vmatprep.subr.mxu0 0.0
    %1186 = vmatpush2.msra.mxu0 0.0
    %1187 = vmatprep.subr.mxu0 0.0
    %1188 = vmatpush2.msra.mxu0 0.0
    %1189 = vmatprep.subr.mxu0 0.0
    %1190 = vmatpush2.msra.mxu0 0.0
    %1191 = vmatprep.subr.mxu0 0.0
    %1192 = vmatpush2.msra.mxu0 0.0
    %1193 = vmatprep.subr.mxu0 0.0
    %1194 = vmatpush2.msra.mxu0 0.0
    %1195 = vmatprep.subr.mxu0 0.0
    %1196 = vmatpush2.msra.mxu0 0.0
    %1197 = vmatprep.subr.mxu0 0.0
    %1198 = vmatpush2.msra.mxu0 0.0
    %1199 = vmatprep.subr.mxu0 0.0
    %1200 = vmatpush2.msra.mxu0 0.0
    %1201 = vmatprep.subr.mxu0 0.0
    %1202 = vmatpush2.msra.mxu0 0.0
    %1203 = vmatprep.subr.mxu0 0.0
    %1204 = vmatpush2.msra.mxu0 0.0
    %1205 = vmatprep.subr.mxu0 0.0
    %1206 = vmatpush2.msra.mxu0 0.0
    %1207 = vmatprep.subr.mxu0 0.0
    %1208 = vmatpush2.msra.mxu0 0.0
    %1209 = vmatprep.mubr.f32.mxu0 0.0
    %1210 = vmatmul.mubr.f32.gmra.mxu0 %v1143
    %v1211 = vpop.f32.mrf.mxu0
    %v1212 = vadd.f32 0.0, %v1211
    %v1213 = vpop.f32.mrf.mxu0
    %1214 = vdwg.mxu0
    %1215 = vrot.lane.b32.xlu0 %v222, 104
    %v1216 = vpop.permute.xlu0 %1215
    %1217 = vrot.lane.b32.xlu0 %v214, 72
    %v1218 = vpop.permute.xlu0 %1217
    %v1219 = vsel %vm227, %v1216, 0
    %v1221 = vsel %vm227, %v1218, 0
    %1223 = vmatprep.subr.mxu0 0.0
    %1224 = vmatpush1.xpose.msra.mxu0 0.0
    %1225 = vmatprep.subr.mxu0 0.0
    %1226 = vmatpush1.xpose.msra.mxu0 0.0
    %1227 = vmatprep.subr.mxu0 0.0
    %1228 = vmatpush1.xpose.msra.mxu0 0.0
    %1229 = vmatprep.subr.mxu0 0.0
    %1230 = vmatpush1.xpose.msra.mxu0 0.0
    %1231 = vmatprep.subr.mxu0 0.0
    %1232 = vmatpush1.xpose.msra.mxu0 0.0
    %1233 = vmatprep.subr.mxu0 0.0
    %1234 = vmatpush1.xpose.msra.mxu0 0.0
    %1235 = vmatprep.subr.mxu0 0.0
    %1236 = vmatpush1.xpose.msra.mxu0 0.0
    %1237 = vmatprep.subr.mxu0 0.0
    %1238 = vmatpush1.xpose.msra.mxu0 0.0
    %1239 = vmatprep.subr.mxu0 0.0
    %1240 = vmatpush1.xpose.msra.mxu0 0.0
    %1241 = vmatprep.subr.mxu0 0.0
    %1242 = vmatpush1.xpose.msra.mxu0 0.0
    %1243 = vmatprep.subr.mxu0 0.0
    %1244 = vmatpush1.xpose.msra.mxu0 0.0
    %1245 = vmatprep.subr.mxu0 0.0
    %1246 = vmatpush1.xpose.msra.mxu0 0.0
    %1247 = vmatprep.subr.mxu0 0.0
    %1248 = vmatpush1.xpose.msra.mxu0 0.0
    %1249 = vmatprep.subr.mxu0 0.0
    %1250 = vmatpush1.xpose.msra.mxu0 0.0
    %1251 = vmatprep.subr.mxu0 0.0
    %1252 = vmatpush1.xpose.msra.mxu0 0.0
    %1253 = vmatprep.subr.mxu0 0.0
    %1254 = vmatpush1.xpose.msra.mxu0 %v1221
    %1255 = vmatprep.subr.mxu0 0.0
    %1256 = vmatpush2.xpose.msra.mxu0 0.0
    %1257 = vmatprep.subr.mxu0 0.0
    %1258 = vmatpush2.xpose.msra.mxu0 0.0
    %1259 = vmatprep.subr.mxu0 0.0
    %1260 = vmatpush2.xpose.msra.mxu0 0.0
    %1261 = vmatprep.subr.mxu0 0.0
    %1262 = vmatpush2.xpose.msra.mxu0 0.0
    %1263 = vmatprep.subr.mxu0 0.0
    %1264 = vmatpush2.xpose.msra.mxu0 0.0
    %1265 = vmatprep.subr.mxu0 0.0
    %1266 = vmatpush2.xpose.msra.mxu0 0.0
    %1267 = vmatprep.subr.mxu0 0.0
    %1268 = vmatpush2.xpose.msra.mxu0 0.0
    %1269 = vmatprep.subr.mxu0 0.0
    %1270 = vmatpush2.xpose.msra.mxu0 0.0
    %1271 = vmatprep.subr.mxu0 0.0
    %1272 = vmatpush2.xpose.msra.mxu0 0.0
    %1273 = vmatprep.subr.mxu0 0.0
    %1274 = vmatpush2.xpose.msra.mxu0 0.0
    %1275 = vmatprep.subr.mxu0 0.0
    %1276 = vmatpush2.xpose.msra.mxu0 0.0
    %1277 = vmatprep.subr.mxu0 0.0
    %1278 = vmatpush2.xpose.msra.mxu0 0.0
    %1279 = vmatprep.subr.mxu0 0.0
    %1280 = vmatpush2.xpose.msra.mxu0 0.0
    %1281 = vmatprep.subr.mxu0 0.0
    %1282 = vmatpush2.xpose.msra.mxu0 0.0
    %1283 = vmatprep.subr.mxu0 0.0
    %1284 = vmatpush2.xpose.msra.mxu0 0.0
    %1285 = vmatprep.subr.mxu0 0.0
    %1286 = vmatpush2.xpose.msra.mxu0 0.0
    %1287 = vmatprep.mubr.f32.mxu0 0.0
    %1288 = vmatmul.mubr.f32.gmra.mxu0 %v1219
    %v1289 = vpop.f32.mrf.mxu0
    %v1290 = vadd.f32 0.0, %v1289
    %v1291 = vpop.f32.mrf.mxu0
    %1292 = vdwg.mxu0
    %1293 = vrot.lane.b32.xlu0 %v223, 104
    %v1294 = vpop.permute.xlu0 %1293
    %1295 = vrot.lane.b32.xlu0 %v219, 72
    %v1296 = vpop.permute.xlu0 %1295
    %v1297 = vsel %vm227, %v1294, 0
    %v1299 = vsel %vm227, %v1296, 0
    %1301 = vmatprep.subr.mxu0 0.0
    %1302 = vmatpush1.xpose.msra.mxu0 0.0
    %1303 = vmatprep.subr.mxu0 0.0
    %1304 = vmatpush1.xpose.msra.mxu0 0.0
    %1305 = vmatprep.subr.mxu0 0.0
    %1306 = vmatpush1.xpose.msra.mxu0 0.0
    %1307 = vmatprep.subr.mxu0 0.0
    %1308 = vmatpush1.xpose.msra.mxu0 0.0
    %1309 = vmatprep.subr.mxu0 0.0
    %1310 = vmatpush1.xpose.msra.mxu0 0.0
    %1311 = vmatprep.subr.mxu0 0.0
    %1312 = vmatpush1.xpose.msra.mxu0 0.0
    %1313 = vmatprep.subr.mxu0 0.0
    %1314 = vmatpush1.xpose.msra.mxu0 0.0
    %1315 = vmatprep.subr.mxu0 0.0
    %1316 = vmatpush1.xpose.msra.mxu0 0.0
    %1317 = vmatprep.subr.mxu0 0.0
    %1318 = vmatpush1.xpose.msra.mxu0 0.0
    %1319 = vmatprep.subr.mxu0 0.0
    %1320 = vmatpush1.xpose.msra.mxu0 0.0
    %1321 = vmatprep.subr.mxu0 0.0
    %1322 = vmatpush1.xpose.msra.mxu0 0.0
    %1323 = vmatprep.subr.mxu0 0.0
    %1324 = vmatpush1.xpose.msra.mxu0 0.0
    %1325 = vmatprep.subr.mxu0 0.0
    %1326 = vmatpush1.xpose.msra.mxu0 0.0
    %1327 = vmatprep.subr.mxu0 0.0
    %1328 = vmatpush1.xpose.msra.mxu0 0.0
    %1329 = vmatprep.subr.mxu0 0.0
    %1330 = vmatpush1.xpose.msra.mxu0 0.0
    %1331 = vmatprep.subr.mxu0 0.0
    %1332 = vmatpush1.xpose.msra.mxu0 %v1299
    %1333 = vmatprep.subr.mxu0 0.0
    %1334 = vmatpush2.xpose.msra.mxu0 0.0
    %1335 = vmatprep.subr.mxu0 0.0
    %1336 = vmatpush2.xpose.msra.mxu0 0.0
    %1337 = vmatprep.subr.mxu0 0.0
    %1338 = vmatpush2.xpose.msra.mxu0 0.0
    %1339 = vmatprep.subr.mxu0 0.0
    %1340 = vmatpush2.xpose.msra.mxu0 0.0
    %1341 = vmatprep.subr.mxu0 0.0
    %1342 = vmatpush2.xpose.msra.mxu0 0.0
    %1343 = vmatprep.subr.mxu0 0.0
    %1344 = vmatpush2.xpose.msra.mxu0 0.0
    %1345 = vmatprep.subr.mxu0 0.0
    %1346 = vmatpush2.xpose.msra.mxu0 0.0
    %1347 = vmatprep.subr.mxu0 0.0
    %1348 = vmatpush2.xpose.msra.mxu0 0.0
    %1349 = vmatprep.subr.mxu0 0.0
    %1350 = vmatpush2.xpose.msra.mxu0 0.0
    %1351 = vmatprep.subr.mxu0 0.0
    %1352 = vmatpush2.xpose.msra.mxu0 0.0
    %1353 = vmatprep.subr.mxu0 0.0
    %1354 = vmatpush2.xpose.msra.mxu0 0.0
    %1355 = vmatprep.subr.mxu0 0.0
    %1356 = vmatpush2.xpose.msra.mxu0 0.0
    %1357 = vmatprep.subr.mxu0 0.0
    %1358 = vmatpush2.xpose.msra.mxu0 0.0
    %1359 = vmatprep.subr.mxu0 0.0
    %1360 = vmatpush2.xpose.msra.mxu0 0.0
    %1361 = vmatprep.subr.mxu0 0.0
    %1362 = vmatpush2.xpose.msra.mxu0 0.0
    %1363 = vmatprep.subr.mxu0 0.0
    %1364 = vmatpush2.xpose.msra.mxu0 0.0
    %1365 = vmatprep.mubr.f32.mxu0 0.0
    %1366 = vmatmul.mubr.f32.gmra.mxu0 %v1297
    %v1367 = vpop.f32.mrf.mxu0
    %v1368 = vadd.f32 0.0, %v1367
    %v1369 = vpop.f32.mrf.mxu0
    %1370 = vdwg.mxu0
    %v1371 = vsel %vm227, %v1290, -inf
    %1372 = vmax.xlane.f32.xlu0 %v1371
    %v1373 = vpop.xlane.xlu0 %1372
    %v1374 = vsel %vm227, %v1368, -inf
    %1375 = vmax.xlane.f32.xlu0 %v1374
    %v1376 = vpop.xlane.xlu0 %1375
    %v1377 = vsub.f32 %v1290, %v1373
    %v1378 = vsub.f32 %v1368, %v1376
    %v1379 = vmul.f32 %v1377, 1.442695
    %v1380 = vpow.pop %v1379
    %v1381 = vmul.f32 %v1378, 1.442695
    %v1382 = vpow.pop %v1381
    %v1383 = vsel %vm227, %v1380, 0.0
    %1384 = vadd.xlane.f32.xlu0 %v1383
    %v1385 = vpop.xlane.xlu0 %1384
    %v1386 = vsel %vm227, %v1382, 0.0
    %1387 = vadd.xlane.f32.xlu0 %v1386
    %v1388 = vpop.xlane.xlu0 %1387
    %v1389 = vrcp.pop %v1385
    %v1390 = vmul.f32 %v1380, %v1389
    %v1391 = vrcp.pop %v1388
    %v1392 = vmul.f32 %v1382, %v1391
    %1393 = vrot.lane.b32.xlu0 %v214, 40
    %v1394 = vpop.permute.xlu0 %1393
    %v1397 = vsel %vm227, %v1390, 0
    %1399 = vmatprep.subr.mxu0 0.0
    %1400 = vmatpush1.msra.mxu0 0.0
    %1401 = vmatprep.subr.mxu0 0.0
    %1402 = vmatpush1.msra.mxu0 0.0
    %1403 = vmatprep.subr.mxu0 0.0
    %1404 = vmatpush1.msra.mxu0 0.0
    %1405 = vmatprep.subr.mxu0 0.0
    %1406 = vmatpush1.msra.mxu0 0.0
    %1407 = vmatprep.subr.mxu0 0.0
    %1408 = vmatpush1.msra.mxu0 0.0
    %1409 = vmatprep.subr.mxu0 0.0
    %1410 = vmatpush1.msra.mxu0 0.0
    %1411 = vmatprep.subr.mxu0 0.0
    %1412 = vmatpush1.msra.mxu0 0.0
    %1413 = vmatprep.subr.mxu0 0.0
    %1414 = vmatpush1.msra.mxu0 0.0
    %1415 = vmatprep.subr.mxu0 0.0
    %1416 = vmatpush1.msra.mxu0 0.0
    %1417 = vmatprep.subr.mxu0 0.0
    %1418 = vmatpush1.msra.mxu0 0.0
    %1419 = vmatprep.subr.mxu0 0.0
    %1420 = vmatpush1.msra.mxu0 0.0
    %1421 = vmatprep.subr.mxu0 0.0
    %1422 = vmatpush1.msra.mxu0 0.0
    %1423 = vmatprep.subr.mxu0 0.0
    %1424 = vmatpush1.msra.mxu0 0.0
    %1425 = vmatprep.subr.mxu0 0.0
    %1426 = vmatpush1.msra.mxu0 0.0
    %1427 = vmatprep.subr.mxu0 0.0
    %1428 = vmatpush1.msra.mxu0 0.0
    %1429 = vmatprep.subr.mxu0 0.0
    %1430 = vmatpush1.msra.mxu0 %v1394
    %1431 = vmatprep.subr.mxu0 0.0
    %1432 = vmatpush2.msra.mxu0 0.0
    %1433 = vmatprep.subr.mxu0 0.0
    %1434 = vmatpush2.msra.mxu0 0.0
    %1435 = vmatprep.subr.mxu0 0.0
    %1436 = vmatpush2.msra.mxu0 0.0
    %1437 = vmatprep.subr.mxu0 0.0
    %1438 = vmatpush2.msra.mxu0 0.0
    %1439 = vmatprep.subr.mxu0 0.0
    %1440 = vmatpush2.msra.mxu0 0.0
    %1441 = vmatprep.subr.mxu0 0.0
    %1442 = vmatpush2.msra.mxu0 0.0
    %1443 = vmatprep.subr.mxu0 0.0
    %1444 = vmatpush2.msra.mxu0 0.0
    %1445 = vmatprep.subr.mxu0 0.0
    %1446 = vmatpush2.msra.mxu0 0.0
    %1447 = vmatprep.subr.mxu0 0.0
    %1448 = vmatpush2.msra.mxu0 0.0
    %1449 = vmatprep.subr.mxu0 0.0
    %1450 = vmatpush2.msra.mxu0 0.0
    %1451 = vmatprep.subr.mxu0 0.0
    %1452 = vmatpush2.msra.mxu0 0.0
    %1453 = vmatprep.subr.mxu0 0.0
    %1454 = vmatpush2.msra.mxu0 0.0
    %1455 = vmatprep.subr.mxu0 0.0
    %1456 = vmatpush2.msra.mxu0 0.0
    %1457 = vmatprep.subr.mxu0 0.0
    %1458 = vmatpush2.msra.mxu0 0.0
    %1459 = vmatprep.subr.mxu0 0.0
    %1460 = vmatpush2.msra.mxu0 0.0
    %1461 = vmatprep.subr.mxu0 0.0
    %1462 = vmatpush2.msra.mxu0 0.0
    %1463 = vmatprep.mubr.f32.mxu0 0.0
    %1464 = vmatmul.mubr.f32.gmra.mxu0 %v1397
    %v1465 = vpop.f32.mrf.mxu0
    %v1466 = vadd.f32 0.0, %v1465
    %v1467 = vpop.f32.mrf.mxu0
    %1468 = vdwg.mxu0
    %1469 = vrot.lane.b32.xlu0 %v219, 40
    %v1470 = vpop.permute.xlu0 %1469
    %v1473 = vsel %vm227, %v1392, 0
    %1475 = vmatprep.subr.mxu0 0.0
    %1476 = vmatpush1.msra.mxu0 0.0
    %1477 = vmatprep.subr.mxu0 0.0
    %1478 = vmatpush1.msra.mxu0 0.0
    %1479 = vmatprep.subr.mxu0 0.0
    %1480 = vmatpush1.msra.mxu0 0.0
    %1481 = vmatprep.subr.mxu0 0.0
    %1482 = vmatpush1.msra.mxu0 0.0
    %1483 = vmatprep.subr.mxu0 0.0
    %1484 = vmatpush1.msra.mxu0 0.0
    %1485 = vmatprep.subr.mxu0 0.0
    %1486 = vmatpush1.msra.mxu0 0.0
    %1487 = vmatprep.subr.mxu0 0.0
    %1488 = vmatpush1.msra.mxu0 0.0
    %1489 = vmatprep.subr.mxu0 0.0
    %1490 = vmatpush1.msra.mxu0 0.0
    %1491 = vmatprep.subr.mxu0 0.0
    %1492 = vmatpush1.msra.mxu0 0.0
    %1493 = vmatprep.subr.mxu0 0.0
    %1494 = vmatpush1.msra.mxu0 0.0
    %1495 = vmatprep.subr.mxu0 0.0
    %1496 = vmatpush1.msra.mxu0 0.0
    %1497 = vmatprep.subr.mxu0 0.0
    %1498 = vmatpush1.msra.mxu0 0.0
    %1499 = vmatprep.subr.mxu0 0.0
    %1500 = vmatpush1.msra.mxu0 0.0
    %1501 = vmatprep.subr.mxu0 0.0
    %1502 = vmatpush1.msra.mxu0 0.0
    %1503 = vmatprep.subr.mxu0 0.0
    %1504 = vmatpush1.msra.mxu0 0.0
    %1505 = vmatprep.subr.mxu0 0.0
    %1506 = vmatpush1.msra.mxu0 %v1470
    %1507 = vmatprep.subr.mxu0 0.0
    %1508 = vmatpush2.msra.mxu0 0.0
    %1509 = vmatprep.subr.mxu0 0.0
    %1510 = vmatpush2.msra.mxu0 0.0
    %1511 = vmatprep.subr.mxu0 0.0
    %1512 = vmatpush2.msra.mxu0 0.0
    %1513 = vmatprep.subr.mxu0 0.0
    %1514 = vmatpush2.msra.mxu0 0.0
    %1515 = vmatprep.subr.mxu0 0.0
    %1516 = vmatpush2.msra.mxu0 0.0
    %1517 = vmatprep.subr.mxu0 0.0
    %1518 = vmatpush2.msra.mxu0 0.0
    %1519 = vmatprep.subr.mxu0 0.0
    %1520 = vmatpush2.msra.mxu0 0.0
    %1521 = vmatprep.subr.mxu0 0.0
    %1522 = vmatpush2.msra.mxu0 0.0
    %1523 = vmatprep.subr.mxu0 0.0
    %1524 = vmatpush2.msra.mxu0 0.0
    %1525 = vmatprep.subr.mxu0 0.0
    %1526 = vmatpush2.msra.mxu0 0.0
    %1527 = vmatprep.subr.mxu0 0.0
    %1528 = vmatpush2.msra.mxu0 0.0
    %1529 = vmatprep.subr.mxu0 0.0
    %1530 = vmatpush2.msra.mxu0 0.0
    %1531 = vmatprep.subr.mxu0 0.0
    %1532 = vmatpush2.msra.mxu0 0.0
    %1533 = vmatprep.subr.mxu0 0.0
    %1534 = vmatpush2.msra.mxu0 0.0
    %1535 = vmatprep.subr.mxu0 0.0
    %1536 = vmatpush2.msra.mxu0 0.0
    %1537 = vmatprep.subr.mxu0 0.0
    %1538 = vmatpush2.msra.mxu0 0.0
    %1539 = vmatprep.mubr.f32.mxu0 0.0
    %1540 = vmatmul.mubr.f32.gmra.mxu0 %v1473
    %v1541 = vpop.f32.mrf.mxu0
    %v1542 = vadd.f32 0.0, %v1541
    %v1543 = vpop.f32.mrf.mxu0
    %1544 = vdwg.mxu0
    %1547 = vrot.lane.b32.xlu0 %v806, 8
    %v1548 = vpop.permute.xlu0 %1547
    %1549 = vrot.lane.b32.xlu0 %v882, 8
    %v1550 = vpop.permute.xlu0 %1549
    %1555 = vrot.lane.b32.xlu0 %v1136, 16
    %v1556 = vpop.permute.xlu0 %1555
    %1557 = vrot.lane.b32.xlu0 %v1212, 16
    %v1558 = vpop.permute.xlu0 %1557
    %1563 = vrot.lane.b32.xlu0 %v1466, 24
    %v1564 = vpop.permute.xlu0 %1563
    %1565 = vrot.lane.b32.xlu0 %v1542, 24
    %v1566 = vpop.permute.xlu0 %1565
    %v1569 = vsel %vm227, %v476, %v1548
    %v1570 = vsel %vm227, %v552, %v1550
    %vm1571 = vcmask 130048
    %v1572 = vsel %vm1571, %v1569, %v1556
    %v1573 = vsel %vm1571, %v1570, %v1558
    %vm1574 = vcmask 195584
    %v1575 = vsel %vm1574, %v1572, %v1564
    %v1576 = vsel %vm1574, %v1573, %v1566
    %v1577 = vld [vmem:[#allocation7] sm:$0xff]
    %v1578 = vld [vmem:[#allocation7 + $0x8] sm:$0xff]
    %v1579 = vld [vmem:[#allocation7 + $0x10] sm:$0xff]
    %v1580 = vld [vmem:[#allocation7 + $0x18] sm:$0xff]
    %v1581 = vld [vmem:[%s6] sm:$0x1]
    %v1583 = vlaneseq
    %v1584 = vshrl.u32 %v1583, 7
    %v1585 = vsub.s32 0, %v1584
    %v1586 = vrot.slane %v1581, %v1585
    %v1589 = vsel %vm70, %v1575, 0
    %v1592 = vsel %vm70, %v1576, 0
    %1594 = vmatprep.subr.mxu0 0.0
    %1595 = vmatpush1.msra.mxu0 0.0
    %1596 = vmatprep.subr.mxu0 0.0
    %1597 = vmatpush1.msra.mxu0 0.0
    %1598 = vmatprep.subr.mxu0 0.0
    %1599 = vmatpush1.msra.mxu0 0.0
    %1600 = vmatprep.subr.mxu0 0.0
    %1601 = vmatpush1.msra.mxu0 0.0
    %1602 = vmatprep.subr.mxu0 0.0
    %1603 = vmatpush1.msra.mxu0 0.0
    %1604 = vmatprep.subr.mxu0 0.0
    %1605 = vmatpush1.msra.mxu0 0.0
    %1606 = vmatprep.subr.mxu0 0.0
    %1607 = vmatpush1.msra.mxu0 0.0
    %1608 = vmatprep.subr.mxu0 0.0
    %1609 = vmatpush1.msra.mxu0 0.0
    %1610 = vmatprep.subr.mxu0 0.0
    %1611 = vmatpush1.msra.mxu0 0.0
    %1612 = vmatprep.subr.mxu0 0.0
    %1613 = vmatpush1.msra.mxu0 0.0
    %1614 = vmatprep.subr.mxu0 0.0
    %1615 = vmatpush1.msra.mxu0 0.0
    %1616 = vmatprep.subr.mxu0 0.0
    %1617 = vmatpush1.msra.mxu0 0.0
    %1618 = vmatprep.subr.mxu0 0.0
    %1619 = vmatpush1.msra.mxu0 %v1580
    %1620 = vmatprep.subr.mxu0 0.0
    %1621 = vmatpush1.msra.mxu0 %v1579
    %1622 = vmatprep.subr.mxu0 0.0
    %1623 = vmatpush1.msra.mxu0 %v1578
    %1624 = vmatprep.subr.mxu0 0.0
    %1625 = vmatpush1.msra.mxu0 %v1577
    %1626 = vmatprep.subr.mxu0 0.0
    %1627 = vmatpush2.msra.mxu0 0.0
    %1628 = vmatprep.subr.mxu0 0.0
    %1629 = vmatpush2.msra.mxu0 0.0
    %1630 = vmatprep.subr.mxu0 0.0
    %1631 = vmatpush2.msra.mxu0 0.0
    %1632 = vmatprep.subr.mxu0 0.0
    %1633 = vmatpush2.msra.mxu0 0.0
    %1634 = vmatprep.subr.mxu0 0.0
    %1635 = vmatpush2.msra.mxu0 0.0
    %1636 = vmatprep.subr.mxu0 0.0
    %1637 = vmatpush2.msra.mxu0 0.0
    %1638 = vmatprep.subr.mxu0 0.0
    %1639 = vmatpush2.msra.mxu0 0.0
    %1640 = vmatprep.subr.mxu0 0.0
    %1641 = vmatpush2.msra.mxu0 0.0
    %1642 = vmatprep.subr.mxu0 0.0
    %1643 = vmatpush2.msra.mxu0 0.0
    %1644 = vmatprep.subr.mxu0 0.0
    %1645 = vmatpush2.msra.mxu0 0.0
    %1646 = vmatprep.subr.mxu0 0.0
    %1647 = vmatpush2.msra.mxu0 0.0
    %1648 = vmatprep.subr.mxu0 0.0
    %1649 = vmatpush2.msra.mxu0 0.0
    %1650 = vmatprep.subr.mxu0 0.0
    %1651 = vmatpush2.msra.mxu0 0.0
    %1652 = vmatprep.subr.mxu0 0.0
    %1653 = vmatpush2.msra.mxu0 0.0
    %1654 = vmatprep.subr.mxu0 0.0
    %1655 = vmatpush2.msra.mxu0 0.0
    %1656 = vmatprep.subr.mxu0 0.0
    %1657 = vmatpush2.msra.mxu0 0.0
    %1658 = vmatprep.mubr.f32.mxu0 0.0
    %1659 = vmatmul.mubr.f32.gmra.mxu0 %v1589
    %v1660 = vpop.f32.mrf.mxu0
    %v1661 = vadd.f32 %v1586, %v1660
    %v1662 = vpop.f32.mrf.mxu0
    %1663 = vmatprep.mubr.f32.mxu0 0.0
    %1664 = vmatmul.mubr.f32.gmra.mxu0 %v1592
    %v1665 = vpop.f32.mrf.mxu0
    %v1666 = vadd.f32 %v1586, %v1665
    %v1667 = vpop.f32.mrf.mxu0
    %1668 = vdwg.mxu0
    %1669 = vst.msk [vmem:[#allocation8] sm:$0xff] %vm70, %v1661
    %1670 = vst.msk [vmem:[#allocation8 + $0x8] sm:$0xff] %vm70, %v1666
    // Predicated region
    $region42: #{tpu_custom_call.1} parent=1 // pred_check
      _
    $region43: #{tpu_custom_call.1} parent=1 // pred_check_branch
      %1672 = sbr.rel (0) target = $region45
    $region44: #{tpu_custom_call.1} parent=1 // pred_region
      %s1674 = ssub.s32 256, 256
      %1675 = vsyncadd [#allocation4], %s1674
      %s1676 = sshll.u32 [#allocation8], 4
      %s1677 = int_to_ptr.vmem [resolvable:$true] %s1676
      %1682 = dma.vmem_to_hbm [thread:$0]  %s1677, 256, %s7, [#allocation4], 128, 128, 8
    $region45: #{tpu_custom_call.1} parent=1 // pred_fallthru
      _
    // Predicated region
    $region46: #{tpu_custom_call.1} parent=1 // pred_check
      _
    $region47: #{tpu_custom_call.1} parent=1 // pred_check_branch
      %1684 = sbr.rel (0) target = $region49
    $region48: #{tpu_custom_call.1} parent=1 // pred_region
      %1685 = dma.done [#allocation4], 256
    $region49: #{tpu_custom_call.1} parent=1 // pred_fallthru
      _
    %1686 = vsyncpa [#allocation3], 1
    %1687 = vsyncpa [#allocation6], 1
    %1688 = vsyncpa [#allocation4], 1

</llo_original>
